<compile_context>
chip_gen: v6e
topology: v6e:2x2x1
jax: 0.10.0
libtpu: 0.0.40
codegen_flags: <defaults>
</compile_context>

<pallas_src>
import functools

import jax
import jax.numpy as jnp
import numpy as np
from jax import lax
from jax.experimental import pallas as pl
from jax.experimental.pallas import tpu as pltpu


def _layernorm(h, g, b, eps=1e-5):
    mu = jnp.mean(h, axis=-1, keepdims=True)
    var = jnp.mean((h - mu) ** 2, axis=-1, keepdims=True)
    return (h - mu) * lax.rsqrt(var + eps) * g + b


def _gelu_exact(x):
    # Matches torch.nn.functional.gelu default (erf-based, approximate='none').
    return 0.5 * x * (1.0 + lax.erf(x * 0.7071067811865476))


def transformer_layer_kernel(
    xq_ref, xkv_ref,
    ln1g_ref, ln1b_ref,
    wqkv_ref, bqkv_ref, wo_ref, bo_ref,
    ln2g_ref, ln2b_ref,
    w1_ref, b1_ref, w2_ref, b2_ref,
    o_ref,
    q_sc, k_sc, v_sc,
    *, n_heads, head_dim, q_tile,
):
    D = n_heads * head_dim
    qi = pl.program_id(1)
    scale = head_dim ** (-0.5)

    # --- per-batch prologue: fused QKV projection for the whole sequence ---
    @pl.when(qi == 0)
    def _compute_qkv():
        xf = xkv_ref[0]                                     # (T, D) f32
        hf = _layernorm(xf, ln1g_ref[...], ln1b_ref[...])   # f32 stats
        qkv = jnp.dot(hf.astype(jnp.bfloat16), wqkv_ref[...],
                      preferred_element_type=jnp.float32) + bqkv_ref[...]
        # Scatter head-major once per batch element (amortized over q tiles).
        for h in range(n_heads):
            lo = h * head_dim
            q_sc[h] = (qkv[:, lo:lo + head_dim] * scale).astype(jnp.bfloat16)
            k_sc[h] = qkv[:, D + lo:D + lo + head_dim].astype(jnp.bfloat16)
            v_sc[h] = qkv[:, 2 * D + lo:2 * D + lo + head_dim].astype(jnp.bfloat16)

    # --- attention for this query tile: x + Attn(LN1(x)) ---
    x = xq_ref[0]                                           # (tq, D) f32
    row0 = pl.multiple_of(qi * q_tile, q_tile)
    q_t = q_sc[:, pl.ds(row0, q_tile), :]                   # (H, tq, hd) bf16, scale folded in
    k_all = k_sc[...]                                       # (H, T, hd) bf16
    v_all = v_sc[...]                                       # (H, T, hd) bf16

    s = jnp.einsum('hqd,hkd->hqk', q_t, k_all,
                   preferred_element_type=jnp.float32)      # (H, tq, T) f32
    s = s - jnp.max(s, axis=-1, keepdims=True)
    p = jnp.exp(s)
    p = p * pl.reciprocal(jnp.sum(p, axis=-1, keepdims=True), approx=True)

    o = jnp.einsum('hqk,hkd->hqd', p.astype(jnp.bfloat16), v_all,
                   preferred_element_type=jnp.float32)      # (H, tq, hd) f32
    proj = jnp.einsum('hqd,hdc->hqc', o.astype(jnp.bfloat16), wo_ref[...],
                      preferred_element_type=jnp.float32)   # (H, tq, D) f32
    attn = jnp.sum(proj, axis=0) + bo_ref[...]              # (tq, D)
    x1 = x + attn

    # --- FFN for this tile: x1 + FFN(LN2(x1)) ---
    h2 = _layernorm(x1, ln2g_ref[...], ln2b_ref[...])
    f = jnp.dot(h2.astype(jnp.bfloat16), w1_ref[...],
                preferred_element_type=jnp.float32) + b1_ref[...]
    f = _gelu_exact(f)
    f = jnp.dot(f.astype(jnp.bfloat16), w2_ref[...],
                preferred_element_type=jnp.float32) + b2_ref[...]

    o_ref[0] = (x1 + f).astype(o_ref.dtype)


def transformer_layer(x, params, n_heads, q_tile=None):
    B, T, D = x.shape
    assert D % n_heads == 0
    head_dim = D // n_heads

    if q_tile is None:
        q_tile = T
        for cand in (256, 128, 64, 32, 16, 8):
            if T % cand == 0:
                q_tile = cand
                break
    assert T % q_tile == 0
    assert q_tile == T or q_tile % 8 == 0
    num_q_tiles = T // q_tile

    mxu_dtype = jnp.bfloat16
    # Fused QKV weight (D, 3D) and bias (1, 3D); per-head output weight (H, hd, D).
    wqkv = jnp.concatenate([params["wq"], params["wk"], params["wv"]],
                           axis=1).astype(mxu_dtype)
    bqkv = jnp.concatenate([params["bq"], params["bk"], params["bv"]], axis=1)
    wo_h = params["wo"].reshape(n_heads, head_dim, D).astype(mxu_dtype)

    flat = [
        params["ln1_g"], params["ln1_b"],
        wqkv, bqkv, wo_h, params["bo"],
        params["ln2_g"], params["ln2_b"],
        params["w1"].astype(mxu_dtype), params["b1"],
        params["w2"].astype(mxu_dtype), params["b2"],
    ]

    def full_spec(a):
        nd = a.ndim
        return pl.BlockSpec(a.shape, lambda b, q, _nd=nd: (0,) * _nd)

    in_specs = [
        pl.BlockSpec((1, q_tile, D), lambda b, q: (b, q, 0)),  # query/residual tile
        pl.BlockSpec((1, T, D), lambda b, q: (b, 0, 0)),       # full seq for QKV projection
    ] + [full_spec(a) for a in flat]

    kernel = functools.partial(
        transformer_layer_kernel,
        n_heads=n_heads, head_dim=head_dim, q_tile=q_tile,
    )

    return pl.pallas_call(
        kernel,
        out_shape=jax.ShapeDtypeStruct((B, T, D), x.dtype),
        grid_spec=pltpu.PrefetchScalarGridSpec(
            num_scalar_prefetch=0,
            grid=(B, num_q_tiles),
            in_specs=in_specs,
            out_specs=pl.BlockSpec((1, q_tile, D), lambda b, q: (b, q, 0)),
            scratch_shapes=[
                pltpu.VMEM((n_heads, T, head_dim), mxu_dtype),  # Q (pre-scaled)
                pltpu.VMEM((n_heads, T, head_dim), mxu_dtype),  # K
                pltpu.VMEM((n_heads, T, head_dim), mxu_dtype),  # V
            ],
        ),
        compiler_params=pltpu.CompilerParams(
            dimension_semantics=("parallel", "arbitrary"),
        ),
    )(x, x, *flat)


def transformer_layer_ref(x, params, n_heads):
    """Plain-JAX f32 reference (same math) for a sanity check."""
    B, T, D = x.shape
    hd = D // n_heads
    scale = hd ** (-0.5)

    h = _layernorm(x, params["ln1_g"], params["ln1_b"])
    q = h @ params["wq"] + params["bq"]
    k = h @ params["wk"] + params["bk"]
    v = h @ params["wv"] + params["bv"]
    q = q.reshape(B, T, n_heads, hd).transpose(0, 2, 1, 3)
    k = k.reshape(B, T, n_heads, hd).transpose(0, 2, 1, 3)
    v = v.reshape(B, T, n_heads, hd).transpose(0, 2, 1, 3)
    s = jnp.einsum("bhqd,bhkd->bhqk", q, k) * scale
    p = jax.nn.softmax(s, axis=-1)
    o = jnp.einsum("bhqk,bhkd->bhqd", p, v)
    o = o.transpose(0, 2, 1, 3).reshape(B, T, D)
    x1 = x + (o @ params["wo"] + params["bo"])

    h2 = _layernorm(x1, params["ln2_g"], params["ln2_b"])
    f = _gelu_exact(h2 @ params["w1"] + params["b1"])
    f = f @ params["w2"] + params["b2"]
    return x1 + f


def make_params(key, dim, fc_scale):
    hidden = fc_scale * dim
    ks = jax.random.split(key, 12)
    std = 0.02

    def w(k, shape):
        return jax.random.normal(k, shape, jnp.float32) * std

    return {
        "ln1_g": jnp.ones((1, dim), jnp.float32),
        "ln1_b": jnp.zeros((1, dim), jnp.float32),
        "wq": w(ks[0], (dim, dim)),
        "bq": w(ks[1], (1, dim)),
        "wk": w(ks[2], (dim, dim)),
        "bk": w(ks[3], (1, dim)),
        "wv": w(ks[4], (dim, dim)),
        "bv": w(ks[5], (1, dim)),
        "wo": w(ks[6], (dim, dim)),
        "bo": w(ks[7], (1, dim)),
        "ln2_g": jnp.ones((1, dim), jnp.float32),
        "ln2_b": jnp.zeros((1, dim), jnp.float32),
        "w1": w(ks[8], (dim, hidden)),
        "b1": w(ks[9], (1, hidden)),
        "w2": w(ks[10], (hidden, dim)),
        "b2": w(ks[11], (1, dim)),
    }


if __name__ == "__main__":
    # Small config consistent with TransformerConfig: dim=32, n_heads=4, fc_scale=4.
    # T=16 with q_tile=8 exercises the query-tiled grid (2 tiles per batch element).
    B, T, D, H, FC = 2, 16, 32, 4, 4

    key = jax.random.PRNGKey(0)
    kx, kp = jax.random.split(key)
    x = jax.random.normal(kx, (B, T, D), jnp.float32)
    params = make_params(kp, D, FC)

    out = jax.block_until_ready(transformer_layer(x, params, n_heads=H, q_tile=8))
    ref = jax.block_until_ready(transformer_layer_ref(x, params, n_heads=H))

    # bf16 MXU operands + approx reciprocal -> slightly looser tolerance than pure f32.
    np.testing.assert_allclose(np.asarray(out), np.asarray(ref), rtol=3e-2, atol=3e-2)

    print("KERNEL_OK")
</pallas_src>

<mosaic_0001>
module attributes {stable_mosaic.version = 11 : i64} {
  func.func @transformer_layer_kernel(%arg0: i32, %arg1: i32, %arg2: memref<1x8x32xf32, #tpu.memory_space<vmem>>, %arg3: memref<1x16x32xf32, #tpu.memory_space<vmem>>, %arg4: memref<1x32xf32, #tpu.memory_space<vmem>>, %arg5: memref<1x32xf32, #tpu.memory_space<vmem>>, %arg6: memref<32x96xbf16, #tpu.memory_space<vmem>>, %arg7: memref<1x96xf32, #tpu.memory_space<vmem>>, %arg8: memref<4x8x32xbf16, #tpu.memory_space<vmem>>, %arg9: memref<1x32xf32, #tpu.memory_space<vmem>>, %arg10: memref<1x32xf32, #tpu.memory_space<vmem>>, %arg11: memref<1x32xf32, #tpu.memory_space<vmem>>, %arg12: memref<32x128xbf16, #tpu.memory_space<vmem>>, %arg13: memref<1x128xf32, #tpu.memory_space<vmem>>, %arg14: memref<128x32xbf16, #tpu.memory_space<vmem>>, %arg15: memref<1x32xf32, #tpu.memory_space<vmem>>, %arg16: memref<1x8x32xf32, #tpu.memory_space<vmem>>, %arg17: memref<4x16x8xbf16, #tpu.memory_space<vmem>>, %arg18: memref<4x16x8xbf16, #tpu.memory_space<vmem>>, %arg19: memref<4x16x8xbf16, #tpu.memory_space<vmem>>) attributes {dimension_semantics = [#tpu.dimension_semantics<parallel>, #tpu.dimension_semantics<arbitrary>], iteration_bounds = array<i64: 2, 2>, scalar_prefetch = 0 : i64, scratch_operands = 3 : i64, tpu.core_type = #tpu.core_type<tc>, window_params = [{transform_indices = @transform_0, window_bounds = array<i64: 1, 8, 32>}, {transform_indices = @transform_1, window_bounds = array<i64: 1, 16, 32>}, {pipeline_mode = #tpu.pipeline_mode<synchronous>, transform_indices = @transform_2, window_bounds = array<i64: 1, 32>}, {pipeline_mode = #tpu.pipeline_mode<synchronous>, transform_indices = @transform_3, window_bounds = array<i64: 1, 32>}, {pipeline_mode = #tpu.pipeline_mode<synchronous>, transform_indices = @transform_4, window_bounds = array<i64: 32, 96>}, {pipeline_mode = #tpu.pipeline_mode<synchronous>, transform_indices = @transform_5, window_bounds = array<i64: 1, 96>}, {pipeline_mode = #tpu.pipeline_mode<synchronous>, transform_indices = @transform_6, window_bounds = array<i64: 4, 8, 32>}, {pipeline_mode = #tpu.pipeline_mode<synchronous>, transform_indices = @transform_7, window_bounds = array<i64: 1, 32>}, {pipeline_mode = #tpu.pipeline_mode<synchronous>, transform_indices = @transform_8, window_bounds = array<i64: 1, 32>}, {pipeline_mode = #tpu.pipeline_mode<synchronous>, transform_indices = @transform_9, window_bounds = array<i64: 1, 32>}, {pipeline_mode = #tpu.pipeline_mode<synchronous>, transform_indices = @transform_10, window_bounds = array<i64: 32, 128>}, {pipeline_mode = #tpu.pipeline_mode<synchronous>, transform_indices = @transform_11, window_bounds = array<i64: 1, 128>}, {pipeline_mode = #tpu.pipeline_mode<synchronous>, transform_indices = @transform_12, window_bounds = array<i64: 128, 32>}, {pipeline_mode = #tpu.pipeline_mode<synchronous>, transform_indices = @transform_13, window_bounds = array<i64: 1, 32>}, {transform_indices = @transform_14, window_bounds = array<i64: 1, 8, 32>}]} {
    %c0_i32 = arith.constant 0 : i32
    %0 = arith.cmpi eq, %arg1, %c0_i32 : i32
    %1 = arith.extui %0 : i1 to i32
    %c0_i32_0 = arith.constant 0 : i32
    %2 = arith.cmpi ne, %1, %c0_i32_0 : i32
    scf.if %2 {
      %c0_46 = arith.constant 0 : index
      %c0_47 = arith.constant 0 : index
      %c0_48 = arith.constant 0 : index
      %80 = vector.load %arg3[%c0_46, %c0_47, %c0_48] : memref<1x16x32xf32, #tpu.memory_space<vmem>>, vector<1x16x32xf32>
      %81 = vector.shape_cast %80 : vector<1x16x32xf32> to vector<16x32xf32>
      %c0_49 = arith.constant 0 : index
      %c0_50 = arith.constant 0 : index
      %82 = vector.load %arg4[%c0_49, %c0_50] : memref<1x32xf32, #tpu.memory_space<vmem>>, vector<1x32xf32>
      %c0_51 = arith.constant 0 : index
      %c0_52 = arith.constant 0 : index
      %83 = vector.load %arg5[%c0_51, %c0_52] : memref<1x32xf32, #tpu.memory_space<vmem>>, vector<1x32xf32>
      %cst_53 = arith.constant dense<0.000000e+00> : vector<16xf32>
      %84 = vector.multi_reduction <add>, %81, %cst_53 [1] : vector<16x32xf32> to vector<16xf32>
      %85 = vector.shape_cast %84 : vector<16xf32> to vector<16x1xf32>
      %cst_54 = arith.constant 3.200000e+01 : f32
      %86 = vector.broadcast %cst_54 : f32 to vector<16x1xf32>
      %87 = arith.divf %85, %86 : vector<16x1xf32>
      %88 = vector.broadcast %87 : vector<16x1xf32> to vector<16x32xf32>
      %89 = arith.subf %81, %88 : vector<16x32xf32>
      %90 = arith.mulf %89, %89 : vector<16x32xf32>
      %cst_55 = arith.constant dense<0.000000e+00> : vector<16xf32>
      %91 = vector.multi_reduction <add>, %90, %cst_55 [1] : vector<16x32xf32> to vector<16xf32>
      %92 = vector.shape_cast %91 : vector<16xf32> to vector<16x1xf32>
      %cst_56 = arith.constant 3.200000e+01 : f32
      %93 = vector.broadcast %cst_56 : f32 to vector<16x1xf32>
      %94 = arith.divf %92, %93 : vector<16x1xf32>
      %95 = vector.broadcast %87 : vector<16x1xf32> to vector<16x32xf32>
      %96 = arith.subf %81, %95 : vector<16x32xf32>
      %cst_57 = arith.constant 9.99999974E-6 : f32
      %97 = vector.broadcast %cst_57 : f32 to vector<16x1xf32>
      %98 = arith.addf %94, %97 : vector<16x1xf32>
      %99 = math.rsqrt %98 : vector<16x1xf32>
      %100 = vector.broadcast %99 : vector<16x1xf32> to vector<16x32xf32>
      %101 = arith.mulf %96, %100 : vector<16x32xf32>
      %102 = vector.broadcast %82 : vector<1x32xf32> to vector<16x32xf32>
      %103 = arith.mulf %101, %102 : vector<16x32xf32>
      %104 = vector.broadcast %83 : vector<1x32xf32> to vector<16x32xf32>
      %105 = arith.addf %103, %104 : vector<16x32xf32>
      %106 = arith.truncf %105 : vector<16x32xf32> to vector<16x32xbf16>
      %c0_58 = arith.constant 0 : index
      %c0_59 = arith.constant 0 : index
      %107 = vector.load %arg6[%c0_58, %c0_59] : memref<32x96xbf16, #tpu.memory_space<vmem>>, vector<32x96xbf16>
      %cst_60 = arith.constant dense<0.000000e+00> : vector<16x96xf32>
      %108 = tpu.matmul %106, %107, %cst_60 {dimension_numbers = #tpu.dot_dimension_numbers<[1], [0], [0], [1], [0, 0, 1, 1], [], []>} : vector<16x32xbf16>, vector<32x96xbf16>, vector<16x96xf32> -> vector<16x96xf32>
      %c0_61 = arith.constant 0 : index
      %c0_62 = arith.constant 0 : index
      %109 = vector.load %arg7[%c0_61, %c0_62] : memref<1x96xf32, #tpu.memory_space<vmem>>, vector<1x96xf32>
      %110 = vector.broadcast %109 : vector<1x96xf32> to vector<16x96xf32>
      %111 = arith.addf %108, %110 : vector<16x96xf32>
      %112 = vector.extract_strided_slice %111 {offsets = [0, 0], sizes = [16, 8], strides = [1, 1]} : vector<16x96xf32> to vector<16x8xf32>
      %cst_63 = arith.constant 0.353553385 : f32
      %113 = vector.broadcast %cst_63 : f32 to vector<16x8xf32>
      %114 = arith.mulf %112, %113 : vector<16x8xf32>
      %115 = arith.truncf %114 : vector<16x8xf32> to vector<16x8xbf16>
      %c0_64 = arith.constant 0 : index
      %c0_65 = arith.constant 0 : index
      %c0_66 = arith.constant 0 : index
      %116 = vector.load %arg17[%c0_64, %c0_65, %c0_66] : memref<4x16x8xbf16, #tpu.memory_space<vmem>>, vector<1x16x8xbf16>
      %117 = vector.shape_cast %116 : vector<1x16x8xbf16> to vector<16x8xbf16>
      %118 = vector.shape_cast %115 : vector<16x8xbf16> to vector<1x16x8xbf16>
      tpu.vector_store %arg17[%c0_64, %c0_65, %c0_66], %118 {strides = array<i32>} : memref<4x16x8xbf16, #tpu.memory_space<vmem>>, vector<1x16x8xbf16>,
      %119 = vector.extract_strided_slice %111 {offsets = [0, 32], sizes = [16, 8], strides = [1, 1]} : vector<16x96xf32> to vector<16x8xf32>
      %120 = arith.truncf %119 : vector<16x8xf32> to vector<16x8xbf16>
      %c0_67 = arith.constant 0 : index
      %c0_68 = arith.constant 0 : index
      %c0_69 = arith.constant 0 : index
      %121 = vector.load %arg18[%c0_67, %c0_68, %c0_69] : memref<4x16x8xbf16, #tpu.memory_space<vmem>>, vector<1x16x8xbf16>
      %122 = vector.shape_cast %121 : vector<1x16x8xbf16> to vector<16x8xbf16>
      %123 = vector.shape_cast %120 : vector<16x8xbf16> to vector<1x16x8xbf16>
      tpu.vector_store %arg18[%c0_67, %c0_68, %c0_69], %123 {strides = array<i32>} : memref<4x16x8xbf16, #tpu.memory_space<vmem>>, vector<1x16x8xbf16>,
      %124 = vector.extract_strided_slice %111 {offsets = [0, 64], sizes = [16, 8], strides = [1, 1]} : vector<16x96xf32> to vector<16x8xf32>
      %125 = arith.truncf %124 : vector<16x8xf32> to vector<16x8xbf16>
      %c0_70 = arith.constant 0 : index
      %c0_71 = arith.constant 0 : index
      %c0_72 = arith.constant 0 : index
      %126 = vector.load %arg19[%c0_70, %c0_71, %c0_72] : memref<4x16x8xbf16, #tpu.memory_space<vmem>>, vector<1x16x8xbf16>
      %127 = vector.shape_cast %126 : vector<1x16x8xbf16> to vector<16x8xbf16>
      %128 = vector.shape_cast %125 : vector<16x8xbf16> to vector<1x16x8xbf16>
      tpu.vector_store %arg19[%c0_70, %c0_71, %c0_72], %128 {strides = array<i32>} : memref<4x16x8xbf16, #tpu.memory_space<vmem>>, vector<1x16x8xbf16>,
      %129 = vector.extract_strided_slice %111 {offsets = [0, 8], sizes = [16, 8], strides = [1, 1]} : vector<16x96xf32> to vector<16x8xf32>
      %cst_73 = arith.constant 0.353553385 : f32
      %130 = vector.broadcast %cst_73 : f32 to vector<16x8xf32>
      %131 = arith.mulf %129, %130 : vector<16x8xf32>
      %132 = arith.truncf %131 : vector<16x8xf32> to vector<16x8xbf16>
      %c1 = arith.constant 1 : index
      %c0_74 = arith.constant 0 : index
      %c0_75 = arith.constant 0 : index
      %133 = vector.load %arg17[%c1, %c0_74, %c0_75] : memref<4x16x8xbf16, #tpu.memory_space<vmem>>, vector<1x16x8xbf16>
      %134 = vector.shape_cast %133 : vector<1x16x8xbf16> to vector<16x8xbf16>
      %135 = vector.shape_cast %132 : vector<16x8xbf16> to vector<1x16x8xbf16>
      tpu.vector_store %arg17[%c1, %c0_74, %c0_75], %135 {strides = array<i32>} : memref<4x16x8xbf16, #tpu.memory_space<vmem>>, vector<1x16x8xbf16>,
      %136 = vector.extract_strided_slice %111 {offsets = [0, 40], sizes = [16, 8], strides = [1, 1]} : vector<16x96xf32> to vector<16x8xf32>
      %137 = arith.truncf %136 : vector<16x8xf32> to vector<16x8xbf16>
      %c1_76 = arith.constant 1 : index
      %c0_77 = arith.constant 0 : index
      %c0_78 = arith.constant 0 : index
      %138 = vector.load %arg18[%c1_76, %c0_77, %c0_78] : memref<4x16x8xbf16, #tpu.memory_space<vmem>>, vector<1x16x8xbf16>
      %139 = vector.shape_cast %138 : vector<1x16x8xbf16> to vector<16x8xbf16>
      %140 = vector.shape_cast %137 : vector<16x8xbf16> to vector<1x16x8xbf16>
      tpu.vector_store %arg18[%c1_76, %c0_77, %c0_78], %140 {strides = array<i32>} : memref<4x16x8xbf16, #tpu.memory_space<vmem>>, vector<1x16x8xbf16>,
      %141 = vector.extract_strided_slice %111 {offsets = [0, 72], sizes = [16, 8], strides = [1, 1]} : vector<16x96xf32> to vector<16x8xf32>
      %142 = arith.truncf %141 : vector<16x8xf32> to vector<16x8xbf16>
      %c1_79 = arith.constant 1 : index
      %c0_80 = arith.constant 0 : index
      %c0_81 = arith.constant 0 : index
      %143 = vector.load %arg19[%c1_79, %c0_80, %c0_81] : memref<4x16x8xbf16, #tpu.memory_space<vmem>>, vector<1x16x8xbf16>
      %144 = vector.shape_cast %143 : vector<1x16x8xbf16> to vector<16x8xbf16>
      %145 = vector.shape_cast %142 : vector<16x8xbf16> to vector<1x16x8xbf16>
      tpu.vector_store %arg19[%c1_79, %c0_80, %c0_81], %145 {strides = array<i32>} : memref<4x16x8xbf16, #tpu.memory_space<vmem>>, vector<1x16x8xbf16>,
      %146 = vector.extract_strided_slice %111 {offsets = [0, 16], sizes = [16, 8], strides = [1, 1]} : vector<16x96xf32> to vector<16x8xf32>
      %cst_82 = arith.constant 0.353553385 : f32
      %147 = vector.broadcast %cst_82 : f32 to vector<16x8xf32>
      %148 = arith.mulf %146, %147 : vector<16x8xf32>
      %149 = arith.truncf %148 : vector<16x8xf32> to vector<16x8xbf16>
      %c2 = arith.constant 2 : index
      %c0_83 = arith.constant 0 : index
      %c0_84 = arith.constant 0 : index
      %150 = vector.load %arg17[%c2, %c0_83, %c0_84] : memref<4x16x8xbf16, #tpu.memory_space<vmem>>, vector<1x16x8xbf16>
      %151 = vector.shape_cast %150 : vector<1x16x8xbf16> to vector<16x8xbf16>
      %152 = vector.shape_cast %149 : vector<16x8xbf16> to vector<1x16x8xbf16>
      tpu.vector_store %arg17[%c2, %c0_83, %c0_84], %152 {strides = array<i32>} : memref<4x16x8xbf16, #tpu.memory_space<vmem>>, vector<1x16x8xbf16>,
      %153 = vector.extract_strided_slice %111 {offsets = [0, 48], sizes = [16, 8], strides = [1, 1]} : vector<16x96xf32> to vector<16x8xf32>
      %154 = arith.truncf %153 : vector<16x8xf32> to vector<16x8xbf16>
      %c2_85 = arith.constant 2 : index
      %c0_86 = arith.constant 0 : index
      %c0_87 = arith.constant 0 : index
      %155 = vector.load %arg18[%c2_85, %c0_86, %c0_87] : memref<4x16x8xbf16, #tpu.memory_space<vmem>>, vector<1x16x8xbf16>
      %156 = vector.shape_cast %155 : vector<1x16x8xbf16> to vector<16x8xbf16>
      %157 = vector.shape_cast %154 : vector<16x8xbf16> to vector<1x16x8xbf16>
      tpu.vector_store %arg18[%c2_85, %c0_86, %c0_87], %157 {strides = array<i32>} : memref<4x16x8xbf16, #tpu.memory_space<vmem>>, vector<1x16x8xbf16>,
      %158 = vector.extract_strided_slice %111 {offsets = [0, 80], sizes = [16, 8], strides = [1, 1]} : vector<16x96xf32> to vector<16x8xf32>
      %159 = arith.truncf %158 : vector<16x8xf32> to vector<16x8xbf16>
      %c2_88 = arith.constant 2 : index
      %c0_89 = arith.constant 0 : index
      %c0_90 = arith.constant 0 : index
      %160 = vector.load %arg19[%c2_88, %c0_89, %c0_90] : memref<4x16x8xbf16, #tpu.memory_space<vmem>>, vector<1x16x8xbf16>
      %161 = vector.shape_cast %160 : vector<1x16x8xbf16> to vector<16x8xbf16>
      %162 = vector.shape_cast %159 : vector<16x8xbf16> to vector<1x16x8xbf16>
      tpu.vector_store %arg19[%c2_88, %c0_89, %c0_90], %162 {strides = array<i32>} : memref<4x16x8xbf16, #tpu.memory_space<vmem>>, vector<1x16x8xbf16>,
      %163 = vector.extract_strided_slice %111 {offsets = [0, 24], sizes = [16, 8], strides = [1, 1]} : vector<16x96xf32> to vector<16x8xf32>
      %cst_91 = arith.constant 0.353553385 : f32
      %164 = vector.broadcast %cst_91 : f32 to vector<16x8xf32>
      %165 = arith.mulf %163, %164 : vector<16x8xf32>
      %166 = arith.truncf %165 : vector<16x8xf32> to vector<16x8xbf16>
      %c3 = arith.constant 3 : index
      %c0_92 = arith.constant 0 : index
      %c0_93 = arith.constant 0 : index
      %167 = vector.load %arg17[%c3, %c0_92, %c0_93] : memref<4x16x8xbf16, #tpu.memory_space<vmem>>, vector<1x16x8xbf16>
      %168 = vector.shape_cast %167 : vector<1x16x8xbf16> to vector<16x8xbf16>
      %169 = vector.shape_cast %166 : vector<16x8xbf16> to vector<1x16x8xbf16>
      tpu.vector_store %arg17[%c3, %c0_92, %c0_93], %169 {strides = array<i32>} : memref<4x16x8xbf16, #tpu.memory_space<vmem>>, vector<1x16x8xbf16>,
      %170 = vector.extract_strided_slice %111 {offsets = [0, 56], sizes = [16, 8], strides = [1, 1]} : vector<16x96xf32> to vector<16x8xf32>
      %171 = arith.truncf %170 : vector<16x8xf32> to vector<16x8xbf16>
      %c3_94 = arith.constant 3 : index
      %c0_95 = arith.constant 0 : index
      %c0_96 = arith.constant 0 : index
      %172 = vector.load %arg18[%c3_94, %c0_95, %c0_96] : memref<4x16x8xbf16, #tpu.memory_space<vmem>>, vector<1x16x8xbf16>
      %173 = vector.shape_cast %172 : vector<1x16x8xbf16> to vector<16x8xbf16>
      %174 = vector.shape_cast %171 : vector<16x8xbf16> to vector<1x16x8xbf16>
      tpu.vector_store %arg18[%c3_94, %c0_95, %c0_96], %174 {strides = array<i32>} : memref<4x16x8xbf16, #tpu.memory_space<vmem>>, vector<1x16x8xbf16>,
      %175 = vector.extract_strided_slice %111 {offsets = [0, 88], sizes = [16, 8], strides = [1, 1]} : vector<16x96xf32> to vector<16x8xf32>
      %176 = arith.truncf %175 : vector<16x8xf32> to vector<16x8xbf16>
      %c3_97 = arith.constant 3 : index
      %c0_98 = arith.constant 0 : index
      %c0_99 = arith.constant 0 : index
      %177 = vector.load %arg19[%c3_97, %c0_98, %c0_99] : memref<4x16x8xbf16, #tpu.memory_space<vmem>>, vector<1x16x8xbf16>
      %178 = vector.shape_cast %177 : vector<1x16x8xbf16> to vector<16x8xbf16>
      %179 = vector.shape_cast %176 : vector<16x8xbf16> to vector<1x16x8xbf16>
      tpu.vector_store %arg19[%c3_97, %c0_98, %c0_99], %179 {strides = array<i32>} : memref<4x16x8xbf16, #tpu.memory_space<vmem>>, vector<1x16x8xbf16>,
    } else {
    }
    %c0 = arith.constant 0 : index
    %c0_1 = arith.constant 0 : index
    %c0_2 = arith.constant 0 : index
    %3 = vector.load %arg2[%c0, %c0_1, %c0_2] : memref<1x8x32xf32, #tpu.memory_space<vmem>>, vector<1x8x32xf32>
    %4 = vector.shape_cast %3 : vector<1x8x32xf32> to vector<8x32xf32>
    %c8_i32 = arith.constant 8 : i32
    %5 = arith.muli %arg1, %c8_i32 : i32
    %6 = tpu.assume_multiple %5, 8 : i32
    %c0_3 = arith.constant 0 : index
    %7 = arith.index_cast %6 : i32 to index
    %c0_4 = arith.constant 0 : index
    %8 = vector.load %arg17[%c0_3, %7, %c0_4] : memref<4x16x8xbf16, #tpu.memory_space<vmem>>, vector<4x8x8xbf16>
    %c0_5 = arith.constant 0 : index
    %c0_6 = arith.constant 0 : index
    %c0_7 = arith.constant 0 : index
    %9 = vector.load %arg18[%c0_5, %c0_6, %c0_7] : memref<4x16x8xbf16, #tpu.memory_space<vmem>>, vector<4x16x8xbf16>
    %c0_8 = arith.constant 0 : index
    %c0_9 = arith.constant 0 : index
    %c0_10 = arith.constant 0 : index
    %10 = vector.load %arg19[%c0_8, %c0_9, %c0_10] : memref<4x16x8xbf16, #tpu.memory_space<vmem>>, vector<4x16x8xbf16>
    "tpu.trace_start"() <{level = 10 : i32, message = "hqd,hkd->hqk"}> : () -> ()
    %cst = arith.constant dense<0.000000e+00> : vector<4x8x16xf32>
    %11 = tpu.matmul %8, %9, %cst {dimension_numbers = #tpu.dot_dimension_numbers<[2], [2], [1], [1], [0, 0, 0, 1, 1, 1], [0], [0]>} : vector<4x8x8xbf16>, vector<4x16x8xbf16>, vector<4x8x16xf32> -> vector<4x8x16xf32>
    "tpu.trace_stop"() : () -> ()
    %cst_11 = arith.constant dense<0xFF800000> : vector<4x8xf32>
    %12 = vector.multi_reduction <maximumf>, %11, %cst_11 [2] : vector<4x8x16xf32> to vector<4x8xf32>
    %13 = vector.shape_cast %12 : vector<4x8xf32> to vector<4x8x1xf32>
    %14 = vector.broadcast %13 : vector<4x8x1xf32> to vector<4x8x16xf32>
    %15 = arith.subf %11, %14 : vector<4x8x16xf32>
    %16 = math.exp %15 : vector<4x8x16xf32>
    %cst_12 = arith.constant dense<0.000000e+00> : vector<4x8xf32>
    %17 = vector.multi_reduction <add>, %16, %cst_12 [2] : vector<4x8x16xf32> to vector<4x8xf32>
    %18 = vector.shape_cast %17 : vector<4x8xf32> to vector<4x8x1xf32>
    %19 = tpu.reciprocal %18 {approx = true} : vector<4x8x1xf32> -> vector<4x8x1xf32>
    %20 = vector.broadcast %19 : vector<4x8x1xf32> to vector<4x8x16xf32>
    %21 = arith.mulf %16, %20 : vector<4x8x16xf32>
    %22 = arith.truncf %21 : vector<4x8x16xf32> to vector<4x8x16xbf16>
    "tpu.trace_start"() <{level = 10 : i32, message = "hqk,hkd->hqd"}> : () -> ()
    %cst_13 = arith.constant dense<0.000000e+00> : vector<4x8x8xf32>
    %23 = tpu.matmul %22, %10, %cst_13 {dimension_numbers = #tpu.dot_dimension_numbers<[2], [1], [1], [2], [0, 0, 0, 1, 1, 2], [0], [0]>} : vector<4x8x16xbf16>, vector<4x16x8xbf16>, vector<4x8x8xf32> -> vector<4x8x8xf32>
    "tpu.trace_stop"() : () -> ()
    %24 = arith.truncf %23 : vector<4x8x8xf32> to vector<4x8x8xbf16>
    %c0_14 = arith.constant 0 : index
    %c0_15 = arith.constant 0 : index
    %c0_16 = arith.constant 0 : index
    %25 = vector.load %arg8[%c0_14, %c0_15, %c0_16] : memref<4x8x32xbf16, #tpu.memory_space<vmem>>, vector<4x8x32xbf16>
    "tpu.trace_start"() <{level = 10 : i32, message = "hqd,hdc->hqc"}> : () -> ()
    %cst_17 = arith.constant dense<0.000000e+00> : vector<4x8x32xf32>
    %26 = tpu.matmul %24, %25, %cst_17 {dimension_numbers = #tpu.dot_dimension_numbers<[2], [1], [1], [2], [0, 0, 0, 1, 1, 2], [0], [0]>} : vector<4x8x8xbf16>, vector<4x8x32xbf16>, vector<4x8x32xf32> -> vector<4x8x32xf32>
    "tpu.trace_stop"() : () -> ()
    %cst_18 = arith.constant dense<0.000000e+00> : vector<8x32xf32>
    %27 = vector.multi_reduction <add>, %26, %cst_18 [0] : vector<4x8x32xf32> to vector<8x32xf32>
    %c0_19 = arith.constant 0 : index
    %c0_20 = arith.constant 0 : index
    %28 = vector.load %arg9[%c0_19, %c0_20] : memref<1x32xf32, #tpu.memory_space<vmem>>, vector<1x32xf32>
    %29 = vector.broadcast %28 : vector<1x32xf32> to vector<8x32xf32>
    %30 = arith.addf %27, %29 : vector<8x32xf32>
    %31 = arith.addf %4, %30 : vector<8x32xf32>
    %c0_21 = arith.constant 0 : index
    %c0_22 = arith.constant 0 : index
    %32 = vector.load %arg10[%c0_21, %c0_22] : memref<1x32xf32, #tpu.memory_space<vmem>>, vector<1x32xf32>
    %c0_23 = arith.constant 0 : index
    %c0_24 = arith.constant 0 : index
    %33 = vector.load %arg11[%c0_23, %c0_24] : memref<1x32xf32, #tpu.memory_space<vmem>>, vector<1x32xf32>
    %cst_25 = arith.constant dense<0.000000e+00> : vector<8xf32>
    %34 = vector.multi_reduction <add>, %31, %cst_25 [1] : vector<8x32xf32> to vector<8xf32>
    %35 = vector.shape_cast %34 : vector<8xf32> to vector<8x1xf32>
    %cst_26 = arith.constant 3.200000e+01 : f32
    %36 = vector.broadcast %cst_26 : f32 to vector<8x1xf32>
    %37 = arith.divf %35, %36 : vector<8x1xf32>
    %38 = vector.broadcast %37 : vector<8x1xf32> to vector<8x32xf32>
    %39 = arith.subf %31, %38 : vector<8x32xf32>
    %40 = arith.mulf %39, %39 : vector<8x32xf32>
    %cst_27 = arith.constant dense<0.000000e+00> : vector<8xf32>
    %41 = vector.multi_reduction <add>, %40, %cst_27 [1] : vector<8x32xf32> to vector<8xf32>
    %42 = vector.shape_cast %41 : vector<8xf32> to vector<8x1xf32>
    %cst_28 = arith.constant 3.200000e+01 : f32
    %43 = vector.broadcast %cst_28 : f32 to vector<8x1xf32>
    %44 = arith.divf %42, %43 : vector<8x1xf32>
    %45 = vector.broadcast %37 : vector<8x1xf32> to vector<8x32xf32>
    %46 = arith.subf %31, %45 : vector<8x32xf32>
    %cst_29 = arith.constant 9.99999974E-6 : f32
    %47 = vector.broadcast %cst_29 : f32 to vector<8x1xf32>
    %48 = arith.addf %44, %47 : vector<8x1xf32>
    %49 = math.rsqrt %48 : vector<8x1xf32>
    %50 = vector.broadcast %49 : vector<8x1xf32> to vector<8x32xf32>
    %51 = arith.mulf %46, %50 : vector<8x32xf32>
    %52 = vector.broadcast %32 : vector<1x32xf32> to vector<8x32xf32>
    %53 = arith.mulf %51, %52 : vector<8x32xf32>
    %54 = vector.broadcast %33 : vector<1x32xf32> to vector<8x32xf32>
    %55 = arith.addf %53, %54 : vector<8x32xf32>
    %56 = arith.truncf %55 : vector<8x32xf32> to vector<8x32xbf16>
    %c0_30 = arith.constant 0 : index
    %c0_31 = arith.constant 0 : index
    %57 = vector.load %arg12[%c0_30, %c0_31] : memref<32x128xbf16, #tpu.memory_space<vmem>>, vector<32x128xbf16>
    %cst_32 = arith.constant dense<0.000000e+00> : vector<8x128xf32>
    %58 = tpu.matmul %56, %57, %cst_32 {dimension_numbers = #tpu.dot_dimension_numbers<[1], [0], [0], [1], [0, 0, 1, 1], [], []>} : vector<8x32xbf16>, vector<32x128xbf16>, vector<8x128xf32> -> vector<8x128xf32>
    %c0_33 = arith.constant 0 : index
    %c0_34 = arith.constant 0 : index
    %59 = vector.load %arg13[%c0_33, %c0_34] : memref<1x128xf32, #tpu.memory_space<vmem>>, vector<1x128xf32>
    %60 = vector.broadcast %59 : vector<1x128xf32> to vector<8x128xf32>
    %61 = arith.addf %58, %60 : vector<8x128xf32>
    %cst_35 = arith.constant 5.000000e-01 : f32
    %62 = vector.broadcast %cst_35 : f32 to vector<8x128xf32>
    %63 = arith.mulf %62, %61 : vector<8x128xf32>
    %cst_36 = arith.constant 0.707106769 : f32
    %64 = vector.broadcast %cst_36 : f32 to vector<8x128xf32>
    %65 = arith.mulf %61, %64 : vector<8x128xf32>
    %66 = math.erf %65 : vector<8x128xf32>
    %cst_37 = arith.constant 1.000000e+00 : f32
    %67 = vector.broadcast %cst_37 : f32 to vector<8x128xf32>
    %68 = arith.addf %67, %66 : vector<8x128xf32>
    %69 = arith.mulf %63, %68 : vector<8x128xf32>
    %70 = arith.truncf %69 : vector<8x128xf32> to vector<8x128xbf16>
    %c0_38 = arith.constant 0 : index
    %c0_39 = arith.constant 0 : index
    %71 = vector.load %arg14[%c0_38, %c0_39] : memref<128x32xbf16, #tpu.memory_space<vmem>>, vector<128x32xbf16>
    %cst_40 = arith.constant dense<0.000000e+00> : vector<8x32xf32>
    %72 = tpu.matmul %70, %71, %cst_40 {dimension_numbers = #tpu.dot_dimension_numbers<[1], [0], [0], [1], [0, 0, 1, 1], [], []>} : vector<8x128xbf16>, vector<128x32xbf16>, vector<8x32xf32> -> vector<8x32xf32>
    %c0_41 = arith.constant 0 : index
    %c0_42 = arith.constant 0 : index
    %73 = vector.load %arg15[%c0_41, %c0_42] : memref<1x32xf32, #tpu.memory_space<vmem>>, vector<1x32xf32>
    %74 = vector.broadcast %73 : vector<1x32xf32> to vector<8x32xf32>
    %75 = arith.addf %72, %74 : vector<8x32xf32>
    %76 = arith.addf %31, %75 : vector<8x32xf32>
    %c0_43 = arith.constant 0 : index
    %c0_44 = arith.constant 0 : index
    %c0_45 = arith.constant 0 : index
    %77 = vector.load %arg16[%c0_43, %c0_44, %c0_45] : memref<1x8x32xf32, #tpu.memory_space<vmem>>, vector<1x8x32xf32>
    %78 = vector.shape_cast %77 : vector<1x8x32xf32> to vector<8x32xf32>
    %79 = vector.shape_cast %76 : vector<8x32xf32> to vector<1x8x32xf32>
    tpu.vector_store %arg16[%c0_43, %c0_44, %c0_45], %79 {strides = array<i32>} : memref<1x8x32xf32, #tpu.memory_space<vmem>>, vector<1x8x32xf32>,
    return
  }
  func.func @transform_0(%arg0: i32, %arg1: i32) -> (i32, i32, i32) {
    %c0_i32 = arith.constant 0 : i32
    %c0_i32_0 = arith.constant 0 : i32
    return %arg0, %arg1, %c0_i32 : i32, i32, i32
  }
  func.func @transform_1(%arg0: i32, %arg1: i32) -> (i32, i32, i32) {
    %c0_i32 = arith.constant 0 : i32
    %c0_i32_0 = arith.constant 0 : i32
    %c0_i32_1 = arith.constant 0 : i32
    return %arg0, %c0_i32, %c0_i32_0 : i32, i32, i32
  }
  func.func @transform_2(%arg0: i32, %arg1: i32) -> (i32, i32) {
    %c0_i32 = arith.constant 0 : i32
    %c0_i32_0 = arith.constant 0 : i32
    %c0_i32_1 = arith.constant 0 : i32
    return %c0_i32, %c0_i32_0 : i32, i32
  }
  func.func @transform_3(%arg0: i32, %arg1: i32) -> (i32, i32) {
    %c0_i32 = arith.constant 0 : i32
    %c0_i32_0 = arith.constant 0 : i32
    %c0_i32_1 = arith.constant 0 : i32
    return %c0_i32, %c0_i32_0 : i32, i32
  }
  func.func @transform_4(%arg0: i32, %arg1: i32) -> (i32, i32) {
    %c0_i32 = arith.constant 0 : i32
    %c0_i32_0 = arith.constant 0 : i32
    %c0_i32_1 = arith.constant 0 : i32
    return %c0_i32, %c0_i32_0 : i32, i32
  }
  func.func @transform_5(%arg0: i32, %arg1: i32) -> (i32, i32) {
    %c0_i32 = arith.constant 0 : i32
    %c0_i32_0 = arith.constant 0 : i32
    %c0_i32_1 = arith.constant 0 : i32
    return %c0_i32, %c0_i32_0 : i32, i32
  }
  func.func @transform_6(%arg0: i32, %arg1: i32) -> (i32, i32, i32) {
    %c0_i32 = arith.constant 0 : i32
    %c0_i32_0 = arith.constant 0 : i32
    %c0_i32_1 = arith.constant 0 : i32
    %c0_i32_2 = arith.constant 0 : i32
    return %c0_i32, %c0_i32_0, %c0_i32_1 : i32, i32, i32
  }
  func.func @transform_7(%arg0: i32, %arg1: i32) -> (i32, i32) {
    %c0_i32 = arith.constant 0 : i32
    %c0_i32_0 = arith.constant 0 : i32
    %c0_i32_1 = arith.constant 0 : i32
    return %c0_i32, %c0_i32_0 : i32, i32
  }
  func.func @transform_8(%arg0: i32, %arg1: i32) -> (i32, i32) {
    %c0_i32 = arith.constant 0 : i32
    %c0_i32_0 = arith.constant 0 : i32
    %c0_i32_1 = arith.constant 0 : i32
    return %c0_i32, %c0_i32_0 : i32, i32
  }
  func.func @transform_9(%arg0: i32, %arg1: i32) -> (i32, i32) {
    %c0_i32 = arith.constant 0 : i32
    %c0_i32_0 = arith.constant 0 : i32
    %c0_i32_1 = arith.constant 0 : i32
    return %c0_i32, %c0_i32_0 : i32, i32
  }
  func.func @transform_10(%arg0: i32, %arg1: i32) -> (i32, i32) {
    %c0_i32 = arith.constant 0 : i32
    %c0_i32_0 = arith.constant 0 : i32
    %c0_i32_1 = arith.constant 0 : i32
    return %c0_i32, %c0_i32_0 : i32, i32
  }
  func.func @transform_11(%arg0: i32, %arg1: i32) -> (i32, i32) {
    %c0_i32 = arith.constant 0 : i32
    %c0_i32_0 = arith.constant 0 : i32
    %c0_i32_1 = arith.constant 0 : i32
    return %c0_i32, %c0_i32_0 : i32, i32
  }
  func.func @transform_12(%arg0: i32, %arg1: i32) -> (i32, i32) {
    %c0_i32 = arith.constant 0 : i32
    %c0_i32_0 = arith.constant 0 : i32
    %c0_i32_1 = arith.constant 0 : i32
    return %c0_i32, %c0_i32_0 : i32, i32
  }
  func.func @transform_13(%arg0: i32, %arg1: i32) -> (i32, i32) {
    %c0_i32 = arith.constant 0 : i32
    %c0_i32_0 = arith.constant 0 : i32
    %c0_i32_1 = arith.constant 0 : i32
    return %c0_i32, %c0_i32_0 : i32, i32
  }
  func.func @transform_14(%arg0: i32, %arg1: i32) -> (i32, i32, i32) {
    %c0_i32 = arith.constant 0 : i32
    %c0_i32_0 = arith.constant 0 : i32
    return %arg0, %arg1, %c0_i32 : i32, i32, i32
  }
}

</mosaic_0001>

<llo_original>
// kernel: tpu_custom_call.1
$region0: #{tpu_custom_call.1}
  #allocation0 [shape = 'u32[]', space=smem, size = 0x4, offset = 0x4, fixed_abs, tag = 'smem constant byte address 0x4 - core index']
  #allocation1 [shape = 'u32[144,128]{1,0:T(1,128)}', space=vmem, size = 0x12000, scoped, tag = 'internal scratch']
  #allocation2 [shape = 'bf16[4,16,8]{2,1,0:T(8,128)(2,1)}', space=vmem, size = 0x4000, scoped, tag = 'scratch operand']
  #allocation3 [shape = 'bf16[4,16,8]{2,1,0:T(8,128)(2,1)}', space=vmem, size = 0x4000, scoped, tag = 'scratch operand']
  #allocation4 [shape = 'bf16[4,16,8]{2,1,0:T(8,128)(2,1)}', space=vmem, size = 0x4000, scoped, tag = 'scratch operand']
  %s0 = inlined_call_operand.vmem [shape: f32[2,16,32], index: 0, kind: input, shape index: {}]
  %s1 = inlined_call_operand.vmem [shape: f32[2,16,32], index: 1, kind: input, shape index: {}]
  %s2 = inlined_call_operand.vmem [shape: f32[1,32], index: 2, kind: input, shape index: {}]
  %s3 = inlined_call_operand.vmem [shape: f32[1,32], index: 3, kind: input, shape index: {}]
  %s4 = inlined_call_operand.vmem [shape: bf16[32,96], index: 4, kind: input, shape index: {}]
  %s5 = inlined_call_operand.vmem [shape: f32[1,96], index: 5, kind: input, shape index: {}]
  %s6 = inlined_call_operand.hbm [shape: bf16[4,8,32], index: 6, kind: input, shape index: {}]
  %s7 = inlined_call_operand.vmem [shape: f32[1,32], index: 7, kind: input, shape index: {}]
  %s8 = inlined_call_operand.vmem [shape: f32[1,32], index: 8, kind: input, shape index: {}]
  %s9 = inlined_call_operand.hbm [shape: f32[1,32], index: 9, kind: input, shape index: {}]
  %s10 = inlined_call_operand.hbm [shape: bf16[32,128], index: 10, kind: input, shape index: {}]
  %s11 = inlined_call_operand.hbm [shape: f32[1,128], index: 11, kind: input, shape index: {}]
  %s12 = inlined_call_operand.vmem [shape: bf16[128,32], index: 12, kind: input, shape index: {}]
  %s13 = inlined_call_operand.vmem [shape: f32[1,32], index: 13, kind: input, shape index: {}]
  %s14 = inlined_call_operand.hbm [shape: f32[2,16,32], index: 14, kind: output, shape index: {}]
  %s15 = sld [smem:[#allocation0]]
  $region109: #{tpu_custom_call.1} parent=0
    _
  %s17 = ssub.s32 1, %s15
  %s18 = scalar_select 0, %s17, %s15
  $region1: #{tpu_custom_call.1} parent=0
    #allocation5 [shape = 'u8[8192]{0}', space=vmem, size = 0x2000, scoped, tag = 'input window, operand 6, single buffered']
    #allocation6 [shape = 's32[2]{0}', space=sflag, size = 0x8, scoped, tag = 'scoped memory for tpu_custom_call.1']
    #allocation7 [shape = 's32[2]{0}', space=sflag, size = 0x8, scoped, tag = 'scoped memory for tpu_custom_call.1']
    #allocation8 [shape = 'u8[512]{0}', space=vmem, size = 0x400, scoped, tag = 'input window, operand 9, single buffered']
    #allocation9 [shape = 's32[1]{0}', space=sflag, size = 0x4, scoped, tag = 'scoped memory for tpu_custom_call.1']
    #allocation10 [shape = 'u8[8192]{0}', space=vmem, size = 0x2000, scoped, tag = 'input window, operand 10, single buffered']
    #allocation11 [shape = 'u8[512]{0}', space=vmem, size = 0x400, scoped, tag = 'input window, operand 11, single buffered']
    #allocation12 [shape = 's32[1]{0}', space=sflag, size = 0x4, scoped, tag = 'scoped memory for tpu_custom_call.1']
    #allocation13 [shape = 'u8[8192]{0}', space=vmem, size = 0x2000, scoped, tag = 'output window, operand 0']
    %19 = vsyncpa [#allocation6], 0
    %20 = vsyncpa [#allocation9], 0
    %21 = vsyncpa [#allocation12], 0
    %22 = vsyncpa [#allocation7], 0
    %s23 = scalar_lea.sflag [#allocation7], 1
    %24 = vsyncpa %s23, 0
    loop: start=0, step=1, limit=6
    $region2: #{tpu_custom_call.1} parent=1 // loop_pre_header
      _
    $region3: #{tpu_custom_call.1} parent=1 // loop_header
      %s26 = sphi 0, %s30
      %p27 = scmp.ge.s32.totalorder %s26, 6
      %s33 = sphi 0, %s45
      %s34 = sphi 0, %s41
      %s35 = sphi 0, %s33
      %s36 = sphi 0, %s34
      %s37 = sphi 0, %s35
      %s38 = sphi 0, %s36
      %s50 = sphi 0, %s52
      %s53 = sphi 0, %s50
      %s54 = sphi 0, %s53
      %s70 = sphi 0, %s54
      %s76 = sphi 0, %s78
      %s79 = sphi 0, %s76
      %s80 = sphi 0, %s79
      %s96 = sphi 0, %s80
      %s100 = sphi 0, %s100
      %s102 = sphi 0, %s100
      %s103 = sphi 0, %s102
      %s117 = sphi 0, %s103
      %s121 = sphi 0, %s121
      %s123 = sphi 0, %s121
      %s124 = sphi 0, %s123
      %s138 = sphi 0, %s124
      %s142 = sphi 0, %s142
      %s144 = sphi 0, %s142
      %s145 = sphi 0, %s144
      %s159 = sphi 0, %s145
      %s163 = sphi 0, %s163
      %s165 = sphi 0, %s163
      %s166 = sphi 0, %s165
      %s180 = sphi 0, %s166
      %s184 = sphi 0, %s184
      %s186 = sphi 0, %s184
      %s187 = sphi 0, %s186
      %s201 = sphi 0, %s187
      %s205 = sphi 0, %s205
      %s207 = sphi 0, %s205
      %s208 = sphi 0, %s207
      %s222 = sphi 0, %s208
      %s226 = sphi 0, %s226
      %s228 = sphi 0, %s226
      %s229 = sphi 0, %s228
      %s243 = sphi 0, %s229
      %s247 = sphi 0, %s247
      %s249 = sphi 0, %s247
      %s250 = sphi 0, %s249
      %s264 = sphi 0, %s250
      %s268 = sphi 0, %s268
      %s270 = sphi 0, %s268
      %s271 = sphi 0, %s270
      %s285 = sphi 0, %s271
      %s289 = sphi 0, %s289
      %s291 = sphi 0, %s289
      %s292 = sphi 0, %s291
      %s306 = sphi 0, %s292
      %s310 = sphi 0, %s310
      %s312 = sphi 0, %s310
      %s313 = sphi 0, %s312
      %s327 = sphi 0, %s313
      %s331 = sphi 0, %s331
      %s333 = sphi 0, %s331
      %s334 = sphi 0, %s333
      %s348 = sphi 0, %s334
      %s356 = sphi 0, %s358
      %s359 = sphi 0, %s356
      %s360 = sphi 0, %s359
      %s376 = sphi 0, %s360
    $region4: #{tpu_custom_call.1} parent=1 // loop_header_branch
      %29 = sbr.rel (%p27) target = $region8
    $region5: #{tpu_custom_call.1} parent=1 // loop_body
      %s31 = ssub.s32 %s26, 1
      %s32 = ssub.s32 %s26, 2
      %s39 = sadd.s32 1, %s34
      %p40 = scmp.ge.s32.totalorder %s39, 2
      %s41 = scalar_select %p40, 0, %s39
      %s42 = sadd.s32 1, %s33
      %s43 = scalar_select %p40, %s42, %s33
      %p44 = scmp.ge.s32.totalorder %s43, 2
      %s45 = scalar_select %p44, 0, %s43
      %s46 = ssub.s32 %s33, %s45
      %s47 = ssub.s32 %s34, %s41
      %s48 = sor.u32 %s46, %s47
      %p49 = scmp.eq.s32.totalorder %s48, 0
      %s51 = sadd.s32 %s50, 1
      %s52 = scalar_select %p49, %s50, %s51
      %p55 = pneg %p49
      %p56 = scmp.eq.s32.totalorder %s26, 3
      %p57 = por %p55, %p56
      %p58 = scmp.ne.s32.totalorder %s50, %s53
      %p59 = scmp.eq.s32.totalorder %s26, 0
      %p60 = por %p58, %p59
      %p61 = scmp.ne.s32.totalorder %s50, %s53
      %p62 = scmp.eq.s32.totalorder %s31, 3
      %p63 = por %p61, %p62
      %p64 = scmp.ne.s32.totalorder %s53, %s54
      %p65 = scmp.eq.s32.totalorder %s31, 0
      %p66 = por %p64, %p65
      %p67 = scmp.ne.s32.totalorder %s53, %s54
      %p68 = scmp.eq.s32.totalorder %s32, 3
      %p69 = por %p67, %p68
      %p71 = scmp.ne.s32.totalorder %s54, %s70
      %p72 = scmp.eq.s32.totalorder %s32, 0
      %p73 = por %p71, %p72
      %s74 = ssub.s32 %s33, %s45
      %p75 = scmp.eq.s32.totalorder %s74, 0
      %s77 = sadd.s32 %s76, 1
      %s78 = scalar_select %p75, %s76, %s77
      %p81 = pneg %p75
      %p82 = scmp.eq.s32.totalorder %s26, 3
      %p83 = por %p81, %p82
      %p84 = scmp.ne.s32.totalorder %s76, %s79
      %p85 = scmp.eq.s32.totalorder %s26, 0
      %p86 = por %p84, %p85
      %p87 = scmp.ne.s32.totalorder %s76, %s79
      %p88 = scmp.eq.s32.totalorder %s31, 3
      %p89 = por %p87, %p88
      %p90 = scmp.ne.s32.totalorder %s79, %s80
      %p91 = scmp.eq.s32.totalorder %s31, 0
      %p92 = por %p90, %p91
      %p93 = scmp.ne.s32.totalorder %s79, %s80
      %p94 = scmp.eq.s32.totalorder %s32, 3
      %p95 = por %p93, %p94
      %p97 = scmp.ne.s32.totalorder %s80, %s96
      %p98 = scmp.eq.s32.totalorder %s32, 0
      %p99 = por %p97, %p98
      %s101 = sadd.s32 %s100, 1
      %p104 = scmp.eq.s32.totalorder %s26, 3
      %p105 = scmp.ne.s32.totalorder %s100, %s102
      %p106 = scmp.eq.s32.totalorder %s26, 0
      %p107 = por %p105, %p106
      %p108 = scmp.ne.s32.totalorder %s100, %s102
      %p109 = scmp.eq.s32.totalorder %s31, 3
      %p110 = por %p108, %p109
      %p111 = scmp.ne.s32.totalorder %s102, %s103
      %p112 = scmp.eq.s32.totalorder %s31, 0
      %p113 = por %p111, %p112
      %p114 = scmp.ne.s32.totalorder %s102, %s103
      %p115 = scmp.eq.s32.totalorder %s32, 3
      %p116 = por %p114, %p115
      %p118 = scmp.ne.s32.totalorder %s103, %s117
      %p119 = scmp.eq.s32.totalorder %s32, 0
      %p120 = por %p118, %p119
      %s122 = sadd.s32 %s121, 1
      %p125 = scmp.eq.s32.totalorder %s26, 3
      %p126 = scmp.ne.s32.totalorder %s121, %s123
      %p127 = scmp.eq.s32.totalorder %s26, 0
      %p128 = por %p126, %p127
      %p129 = scmp.ne.s32.totalorder %s121, %s123
      %p130 = scmp.eq.s32.totalorder %s31, 3
      %p131 = por %p129, %p130
      %p132 = scmp.ne.s32.totalorder %s123, %s124
      %p133 = scmp.eq.s32.totalorder %s31, 0
      %p134 = por %p132, %p133
      %p135 = scmp.ne.s32.totalorder %s123, %s124
      %p136 = scmp.eq.s32.totalorder %s32, 3
      %p137 = por %p135, %p136
      %p139 = scmp.ne.s32.totalorder %s124, %s138
      %p140 = scmp.eq.s32.totalorder %s32, 0
      %p141 = por %p139, %p140
      %s143 = sadd.s32 %s142, 1
      %p146 = scmp.eq.s32.totalorder %s26, 3
      %p147 = scmp.ne.s32.totalorder %s142, %s144
      %p148 = scmp.eq.s32.totalorder %s26, 0
      %p149 = por %p147, %p148
      %p150 = scmp.ne.s32.totalorder %s142, %s144
      %p151 = scmp.eq.s32.totalorder %s31, 3
      %p152 = por %p150, %p151
      %p153 = scmp.ne.s32.totalorder %s144, %s145
      %p154 = scmp.eq.s32.totalorder %s31, 0
      %p155 = por %p153, %p154
      %p156 = scmp.ne.s32.totalorder %s144, %s145
      %p157 = scmp.eq.s32.totalorder %s32, 3
      %p158 = por %p156, %p157
      %p160 = scmp.ne.s32.totalorder %s145, %s159
      %p161 = scmp.eq.s32.totalorder %s32, 0
      %p162 = por %p160, %p161
      %s164 = sadd.s32 %s163, 1
      %p167 = scmp.eq.s32.totalorder %s26, 3
      %p168 = scmp.ne.s32.totalorder %s163, %s165
      %p169 = scmp.eq.s32.totalorder %s26, 0
      %p170 = por %p168, %p169
      %p171 = scmp.ne.s32.totalorder %s163, %s165
      %p172 = scmp.eq.s32.totalorder %s31, 3
      %p173 = por %p171, %p172
      %p174 = scmp.ne.s32.totalorder %s165, %s166
      %p175 = scmp.eq.s32.totalorder %s31, 0
      %p176 = por %p174, %p175
      %p177 = scmp.ne.s32.totalorder %s165, %s166
      %p178 = scmp.eq.s32.totalorder %s32, 3
      %p179 = por %p177, %p178
      %p181 = scmp.ne.s32.totalorder %s166, %s180
      %p182 = scmp.eq.s32.totalorder %s32, 0
      %p183 = por %p181, %p182
      %s185 = sadd.s32 %s184, 1
      %p188 = scmp.eq.s32.totalorder %s26, 3
      %p189 = scmp.ne.s32.totalorder %s184, %s186
      %p190 = scmp.eq.s32.totalorder %s26, 0
      %p191 = por %p189, %p190
      %p192 = scmp.ne.s32.totalorder %s184, %s186
      %p193 = scmp.eq.s32.totalorder %s31, 3
      %p194 = por %p192, %p193
      %p195 = scmp.ne.s32.totalorder %s186, %s187
      %p196 = scmp.eq.s32.totalorder %s31, 0
      %p197 = por %p195, %p196
      %p198 = scmp.ne.s32.totalorder %s186, %s187
      %p199 = scmp.eq.s32.totalorder %s32, 3
      %p200 = por %p198, %p199
      %p202 = scmp.ne.s32.totalorder %s187, %s201
      %p203 = scmp.eq.s32.totalorder %s32, 0
      %p204 = por %p202, %p203
      %s206 = sadd.s32 %s205, 1
      %p209 = scmp.eq.s32.totalorder %s26, 3
      %p210 = scmp.ne.s32.totalorder %s205, %s207
      %p211 = scmp.eq.s32.totalorder %s26, 0
      %p212 = por %p210, %p211
      %p213 = scmp.ne.s32.totalorder %s205, %s207
      %p214 = scmp.eq.s32.totalorder %s31, 3
      %p215 = por %p213, %p214
      %p216 = scmp.ne.s32.totalorder %s207, %s208
      %p217 = scmp.eq.s32.totalorder %s31, 0
      %p218 = por %p216, %p217
      %p219 = scmp.ne.s32.totalorder %s207, %s208
      %p220 = scmp.eq.s32.totalorder %s32, 3
      %p221 = por %p219, %p220
      %p223 = scmp.ne.s32.totalorder %s208, %s222
      %p224 = scmp.eq.s32.totalorder %s32, 0
      %p225 = por %p223, %p224
      %s227 = sadd.s32 %s226, 1
      %p230 = scmp.eq.s32.totalorder %s26, 3
      %p231 = scmp.ne.s32.totalorder %s226, %s228
      %p232 = scmp.eq.s32.totalorder %s26, 0
      %p233 = por %p231, %p232
      %p234 = scmp.ne.s32.totalorder %s226, %s228
      %p235 = scmp.eq.s32.totalorder %s31, 3
      %p236 = por %p234, %p235
      %p237 = scmp.ne.s32.totalorder %s228, %s229
      %p238 = scmp.eq.s32.totalorder %s31, 0
      %p239 = por %p237, %p238
      %p240 = scmp.ne.s32.totalorder %s228, %s229
      %p241 = scmp.eq.s32.totalorder %s32, 3
      %p242 = por %p240, %p241
      %p244 = scmp.ne.s32.totalorder %s229, %s243
      %p245 = scmp.eq.s32.totalorder %s32, 0
      %p246 = por %p244, %p245
      %s248 = sadd.s32 %s247, 1
      %p251 = scmp.eq.s32.totalorder %s26, 3
      %p252 = scmp.ne.s32.totalorder %s247, %s249
      %p253 = scmp.eq.s32.totalorder %s26, 0
      %p254 = por %p252, %p253
      %p255 = scmp.ne.s32.totalorder %s247, %s249
      %p256 = scmp.eq.s32.totalorder %s31, 3
      %p257 = por %p255, %p256
      %p258 = scmp.ne.s32.totalorder %s249, %s250
      %p259 = scmp.eq.s32.totalorder %s31, 0
      %p260 = por %p258, %p259
      %p261 = scmp.ne.s32.totalorder %s249, %s250
      %p262 = scmp.eq.s32.totalorder %s32, 3
      %p263 = por %p261, %p262
      %p265 = scmp.ne.s32.totalorder %s250, %s264
      %p266 = scmp.eq.s32.totalorder %s32, 0
      %p267 = por %p265, %p266
      %s269 = sadd.s32 %s268, 1
      %p272 = scmp.eq.s32.totalorder %s26, 3
      %p273 = scmp.ne.s32.totalorder %s268, %s270
      %p274 = scmp.eq.s32.totalorder %s26, 0
      %p275 = por %p273, %p274
      %p276 = scmp.ne.s32.totalorder %s268, %s270
      %p277 = scmp.eq.s32.totalorder %s31, 3
      %p278 = por %p276, %p277
      %p279 = scmp.ne.s32.totalorder %s270, %s271
      %p280 = scmp.eq.s32.totalorder %s31, 0
      %p281 = por %p279, %p280
      %p282 = scmp.ne.s32.totalorder %s270, %s271
      %p283 = scmp.eq.s32.totalorder %s32, 3
      %p284 = por %p282, %p283
      %p286 = scmp.ne.s32.totalorder %s271, %s285
      %p287 = scmp.eq.s32.totalorder %s32, 0
      %p288 = por %p286, %p287
      %s290 = sadd.s32 %s289, 1
      %p293 = scmp.eq.s32.totalorder %s26, 3
      %p294 = scmp.ne.s32.totalorder %s289, %s291
      %p295 = scmp.eq.s32.totalorder %s26, 0
      %p296 = por %p294, %p295
      %p297 = scmp.ne.s32.totalorder %s289, %s291
      %p298 = scmp.eq.s32.totalorder %s31, 3
      %p299 = por %p297, %p298
      %p300 = scmp.ne.s32.totalorder %s291, %s292
      %p301 = scmp.eq.s32.totalorder %s31, 0
      %p302 = por %p300, %p301
      %p303 = scmp.ne.s32.totalorder %s291, %s292
      %p304 = scmp.eq.s32.totalorder %s32, 3
      %p305 = por %p303, %p304
      %p307 = scmp.ne.s32.totalorder %s292, %s306
      %p308 = scmp.eq.s32.totalorder %s32, 0
      %p309 = por %p307, %p308
      %s311 = sadd.s32 %s310, 1
      %p314 = scmp.eq.s32.totalorder %s26, 3
      %p315 = scmp.ne.s32.totalorder %s310, %s312
      %p316 = scmp.eq.s32.totalorder %s26, 0
      %p317 = por %p315, %p316
      %p318 = scmp.ne.s32.totalorder %s310, %s312
      %p319 = scmp.eq.s32.totalorder %s31, 3
      %p320 = por %p318, %p319
      %p321 = scmp.ne.s32.totalorder %s312, %s313
      %p322 = scmp.eq.s32.totalorder %s31, 0
      %p323 = por %p321, %p322
      %p324 = scmp.ne.s32.totalorder %s312, %s313
      %p325 = scmp.eq.s32.totalorder %s32, 3
      %p326 = por %p324, %p325
      %p328 = scmp.ne.s32.totalorder %s313, %s327
      %p329 = scmp.eq.s32.totalorder %s32, 0
      %p330 = por %p328, %p329
      %s332 = sadd.s32 %s331, 1
      %p335 = scmp.eq.s32.totalorder %s26, 3
      %p336 = scmp.ne.s32.totalorder %s331, %s333
      %p337 = scmp.eq.s32.totalorder %s26, 0
      %p338 = por %p336, %p337
      %p339 = scmp.ne.s32.totalorder %s331, %s333
      %p340 = scmp.eq.s32.totalorder %s31, 3
      %p341 = por %p339, %p340
      %p342 = scmp.ne.s32.totalorder %s333, %s334
      %p343 = scmp.eq.s32.totalorder %s31, 0
      %p344 = por %p342, %p343
      %p345 = scmp.ne.s32.totalorder %s333, %s334
      %p346 = scmp.eq.s32.totalorder %s32, 3
      %p347 = por %p345, %p346
      %p349 = scmp.ne.s32.totalorder %s334, %s348
      %p350 = scmp.eq.s32.totalorder %s32, 0
      %p351 = por %p349, %p350
      %s352 = ssub.s32 %s33, %s45
      %s353 = ssub.s32 %s34, %s41
      %s354 = sor.u32 %s352, %s353
      %p355 = scmp.eq.s32.totalorder %s354, 0
      %s357 = sadd.s32 %s356, 1
      %s358 = scalar_select %p355, %s356, %s357
      %p361 = pneg %p355
      %p362 = scmp.eq.s32.totalorder %s26, 3
      %p363 = por %p361, %p362
      %p364 = scmp.ne.s32.totalorder %s356, %s359
      %p365 = scmp.eq.s32.totalorder %s26, 0
      %p366 = por %p364, %p365
      %p367 = scmp.ne.s32.totalorder %s356, %s359
      %p368 = scmp.eq.s32.totalorder %s31, 3
      %p369 = por %p367, %p368
      %p370 = scmp.ne.s32.totalorder %s359, %s360
      %p371 = scmp.eq.s32.totalorder %s31, 0
      %p372 = por %p370, %p371
      %p373 = scmp.ne.s32.totalorder %s359, %s360
      %p374 = scmp.eq.s32.totalorder %s32, 3
      %p375 = por %p373, %p374
      %p377 = scmp.ne.s32.totalorder %s360, %s376
      %p378 = scmp.eq.s32.totalorder %s32, 0
      %p379 = por %p377, %p378
      %p380 = scmp.le.s32.totalorder 1, %s26
      %p381 = scmp.lt.s32.totalorder %s26, 5
      %p382 = pnand %p380, %p381
      %p383 = pneg %p382
      // Predicated region
      $region9: #{tpu_custom_call.1} parent=5 // pred_check
        _
      $region10: #{tpu_custom_call.1} parent=5 // pred_check_branch
        %385 = sbr.rel (%p382) target = $region12
      $region11: #{tpu_custom_call.1} parent=5 // pred_region
        %s386 = ssub.s32 %s26, 1
        // Predicated region
        $region13: #{tpu_custom_call.1} parent=11 // pred_check
          %p387 = pneg %p113
        $region14: #{tpu_custom_call.1} parent=11 // pred_check_branch
          %389 = sbr.rel (%p387) target = $region16
        $region15: #{tpu_custom_call.1} parent=11 // pred_region
          _
        $region16: #{tpu_custom_call.1} parent=11 // pred_fallthru
          _
        // Predicated region
        $region17: #{tpu_custom_call.1} parent=11 // pred_check
          %p390 = pneg %p134
        $region18: #{tpu_custom_call.1} parent=11 // pred_check_branch
          %392 = sbr.rel (%p390) target = $region20
        $region19: #{tpu_custom_call.1} parent=11 // pred_region
          _
        $region20: #{tpu_custom_call.1} parent=11 // pred_fallthru
          _
        // Predicated region
        $region21: #{tpu_custom_call.1} parent=11 // pred_check
          %p393 = pneg %p155
        $region22: #{tpu_custom_call.1} parent=11 // pred_check_branch
          %395 = sbr.rel (%p393) target = $region24
        $region23: #{tpu_custom_call.1} parent=11 // pred_region
          _
        $region24: #{tpu_custom_call.1} parent=11 // pred_fallthru
          _
        // Predicated region
        $region25: #{tpu_custom_call.1} parent=11 // pred_check
          %p396 = pneg %p176
        $region26: #{tpu_custom_call.1} parent=11 // pred_check_branch
          %398 = sbr.rel (%p396) target = $region28
        $region27: #{tpu_custom_call.1} parent=11 // pred_region
          _
        $region28: #{tpu_custom_call.1} parent=11 // pred_fallthru
          _
        // Predicated region
        $region29: #{tpu_custom_call.1} parent=11 // pred_check
          %p399 = pneg %p197
        $region30: #{tpu_custom_call.1} parent=11 // pred_check_branch
          %401 = sbr.rel (%p399) target = $region32
        $region31: #{tpu_custom_call.1} parent=11 // pred_region
          %s403 = ssub.s32 256, 256
          %404 = vsyncadd [#allocation6], %s403
          %s405 = sshll.u32 [#allocation5], 4
          %s406 = int_to_ptr.vmem [resolvable:$true] %s405
          %411 = dma.hbm_to_vmem [thread:$0]  %s6, 256, %s406, [#allocation6], 64, 64, 4
        $region32: #{tpu_custom_call.1} parent=11 // pred_fallthru
          _
        // Predicated region
        $region33: #{tpu_custom_call.1} parent=11 // pred_check
          %p412 = pneg %p218
        $region34: #{tpu_custom_call.1} parent=11 // pred_check_branch
          %414 = sbr.rel (%p412) target = $region36
        $region35: #{tpu_custom_call.1} parent=11 // pred_region
          _
        $region36: #{tpu_custom_call.1} parent=11 // pred_fallthru
          _
        // Predicated region
        $region37: #{tpu_custom_call.1} parent=11 // pred_check
          %p415 = pneg %p239
        $region38: #{tpu_custom_call.1} parent=11 // pred_check_branch
          %417 = sbr.rel (%p415) target = $region40
        $region39: #{tpu_custom_call.1} parent=11 // pred_region
          _
        $region40: #{tpu_custom_call.1} parent=11 // pred_fallthru
          _
        // Predicated region
        $region41: #{tpu_custom_call.1} parent=11 // pred_check
          %p418 = pneg %p260
        $region42: #{tpu_custom_call.1} parent=11 // pred_check_branch
          %420 = sbr.rel (%p418) target = $region44
        $region43: #{tpu_custom_call.1} parent=11 // pred_region
          %s422 = ssub.s32 16, 16
          %423 = vsyncadd [#allocation9], %s422
          %s425 = sshll.u32 [#allocation8], 4
          %s426 = int_to_ptr.vmem [resolvable:$true] %s425
          %428 = dma.hbm_to_vmem [thread:$0]  %s9, 16, %s426, [#allocation9]
        $region44: #{tpu_custom_call.1} parent=11 // pred_fallthru
          _
        // Predicated region
        $region45: #{tpu_custom_call.1} parent=11 // pred_check
          %p429 = pneg %p281
        $region46: #{tpu_custom_call.1} parent=11 // pred_check_branch
          %431 = sbr.rel (%p429) target = $region48
        $region47: #{tpu_custom_call.1} parent=11 // pred_region
          %s433 = ssub.s32 256, 256
          %434 = vsyncadd [#allocation9], %s433
          %s435 = sshll.u32 [#allocation10], 4
          %s436 = int_to_ptr.vmem [resolvable:$true] %s435
          %441 = dma.hbm_to_vmem [thread:$0]  %s10, 256, %s436, [#allocation9], 64, 64, 4
        $region48: #{tpu_custom_call.1} parent=11 // pred_fallthru
          _
        // Predicated region
        $region49: #{tpu_custom_call.1} parent=11 // pred_check
          %p442 = pneg %p302
        $region50: #{tpu_custom_call.1} parent=11 // pred_check_branch
          %444 = sbr.rel (%p442) target = $region52
        $region51: #{tpu_custom_call.1} parent=11 // pred_region
          %s446 = ssub.s32 16, 16
          %447 = vsyncadd [#allocation12], %s446
          %s449 = sshll.u32 [#allocation11], 4
          %s450 = int_to_ptr.vmem [resolvable:$true] %s449
          %452 = dma.hbm_to_vmem [thread:$0]  %s11, 16, %s450, [#allocation12]
        $region52: #{tpu_custom_call.1} parent=11 // pred_fallthru
          _
        // Predicated region
        $region53: #{tpu_custom_call.1} parent=11 // pred_check
          %p453 = pneg %p323
        $region54: #{tpu_custom_call.1} parent=11 // pred_check_branch
          %455 = sbr.rel (%p453) target = $region56
        $region55: #{tpu_custom_call.1} parent=11 // pred_region
          _
        $region56: #{tpu_custom_call.1} parent=11 // pred_fallthru
          _
        // Predicated region
        $region57: #{tpu_custom_call.1} parent=11 // pred_check
          %p456 = pneg %p344
        $region58: #{tpu_custom_call.1} parent=11 // pred_check_branch
          %458 = sbr.rel (%p456) target = $region60
        $region59: #{tpu_custom_call.1} parent=11 // pred_region
          _
        $region60: #{tpu_custom_call.1} parent=11 // pred_fallthru
          _
      $region12: #{tpu_custom_call.1} parent=5 // pred_fallthru
        _
      %p459 = scmp.lt.s32.totalorder %s26, 4
      // Predicated region
      $region61: #{tpu_custom_call.1} parent=5 // pred_check
        %p460 = pneg %p459
      $region62: #{tpu_custom_call.1} parent=5 // pred_check_branch
        %462 = sbr.rel (%p460) target = $region64
      $region63: #{tpu_custom_call.1} parent=5 // pred_region
        // Predicated region
        $region65: #{tpu_custom_call.1} parent=63 // pred_check
          %p463 = pneg %p60
        $region66: #{tpu_custom_call.1} parent=63 // pred_check_branch
          %465 = sbr.rel (%p463) target = $region68
        $region67: #{tpu_custom_call.1} parent=63 // pred_region
          %p466 = scmp.lt.s32.totalorder %s33, 1
          %s467 = scalar_select %p466, %s33, 1
          %p468 = scmp.lt.s32.totalorder %s34, 1
          %s469 = scalar_select %p468, %s34, 1
          %s470 = smul.addr %s467, 2
          %s471 = sadd.s32 %s469, %s470
          %s472 = smul.addr %s471, 8
          %s473 = scalar_lea.vmem %s0, %s472
        $region68: #{tpu_custom_call.1} parent=63 // pred_fallthru
          _
        // Predicated region
        $region69: #{tpu_custom_call.1} parent=63 // pred_check
          %p474 = pneg %p86
        $region70: #{tpu_custom_call.1} parent=63 // pred_check_branch
          %476 = sbr.rel (%p474) target = $region72
        $region71: #{tpu_custom_call.1} parent=63 // pred_region
          %p477 = scmp.lt.s32.totalorder %s33, 1
          %s478 = scalar_select %p477, %s33, 1
          %s479 = smul.addr %s478, 2
          %s480 = smul.addr %s479, 8
          %s481 = scalar_lea.vmem %s1, %s480
        $region72: #{tpu_custom_call.1} parent=63 // pred_fallthru
          _
      $region64: #{tpu_custom_call.1} parent=5 // pred_fallthru
        _
      %p482 = scmp.le.s32.totalorder 1, %s26
      %p483 = scmp.lt.s32.totalorder %s26, 5
      %p484 = pnand %p482, %p483
      %p485 = pneg %p484
      // Predicated region
      $region73: #{tpu_custom_call.1} parent=5 // pred_check
        _
      $region74: #{tpu_custom_call.1} parent=5 // pred_check_branch
        %487 = sbr.rel (%p484) target = $region76
      $region75: #{tpu_custom_call.1} parent=5 // pred_region
        %s488 = ssub.s32 %s26, 1
        // Predicated region
        $region77: #{tpu_custom_call.1} parent=75 // pred_check
          %p489 = pneg %p197
        $region78: #{tpu_custom_call.1} parent=75 // pred_check_branch
          %491 = sbr.rel (%p489) target = $region80
        $region79: #{tpu_custom_call.1} parent=75 // pred_region
          %492 = dma.done [#allocation6], 256
        $region80: #{tpu_custom_call.1} parent=75 // pred_fallthru
          _
        // Predicated region
        $region81: #{tpu_custom_call.1} parent=75 // pred_check
          %p493 = pneg %p260
        $region82: #{tpu_custom_call.1} parent=75 // pred_check_branch
          %495 = sbr.rel (%p493) target = $region84
        $region83: #{tpu_custom_call.1} parent=75 // pred_region
          %496 = dma.done [#allocation9], 16
        $region84: #{tpu_custom_call.1} parent=75 // pred_fallthru
          _
        // Predicated region
        $region85: #{tpu_custom_call.1} parent=75 // pred_check
          %p497 = pneg %p281
        $region86: #{tpu_custom_call.1} parent=75 // pred_check_branch
          %499 = sbr.rel (%p497) target = $region88
        $region87: #{tpu_custom_call.1} parent=75 // pred_region
          %500 = dma.done [#allocation9], 256
        $region88: #{tpu_custom_call.1} parent=75 // pred_fallthru
          _
        // Predicated region
        $region89: #{tpu_custom_call.1} parent=75 // pred_check
          %p501 = pneg %p302
        $region90: #{tpu_custom_call.1} parent=75 // pred_check_branch
          %503 = sbr.rel (%p501) target = $region92
        $region91: #{tpu_custom_call.1} parent=75 // pred_region
          %504 = dma.done [#allocation12], 16
        $region92: #{tpu_custom_call.1} parent=75 // pred_fallthru
          _
        %p505 = scmp.lt.s32.totalorder %s35, 1
        %s506 = scalar_select %p505, %s35, 1
        %p507 = scmp.lt.s32.totalorder %s36, 1
        %s508 = scalar_select %p507, %s36, 1
        %s509 = smul.addr %s506, 2
        %s510 = sadd.s32 %s508, %s509
        %s511 = smul.addr %s510, 8
        %s512 = scalar_lea.vmem %s0, %s511
        %p513 = pneg %p66
        %p514 = pneg %p63
        %p515 = scmp.lt.s32.totalorder %s35, 1
        %s516 = scalar_select %p515, %s35, 1
        %s517 = smul.addr %s516, 2
        %s518 = smul.addr %s517, 8
        %s519 = scalar_lea.vmem %s1, %s518
        %p520 = pneg %p92
        %p521 = pneg %p89
        %p522 = pneg %p113
        %p523 = pneg %p110
        %p524 = pneg %p134
        %p525 = pneg %p131
        %p526 = pneg %p155
        %p527 = pneg %p152
        %p528 = pneg %p176
        %p529 = pneg %p173
        %p530 = pneg %p197
        %p531 = pneg %p194
        %p532 = pneg %p218
        %p533 = pneg %p215
        %p534 = pneg %p239
        %p535 = pneg %p236
        %p536 = pneg %p260
        %p537 = pneg %p257
        %p538 = pneg %p281
        %p539 = pneg %p278
        %p540 = pneg %p302
        %p541 = pneg %p299
        %p542 = pneg %p323
        %p543 = pneg %p320
        %p544 = pneg %p344
        %p545 = pneg %p341
        %p546 = pneg %p372
        %p547 = pneg %p369
        %s548 = sand.u32 %s359, 1
        %s549 = scalar_lea.sflag [#allocation7], %s548
        %s550 = sand.u32 %s359, 1
        %s551 = smul.addr %s550, 8
        %s552 = scalar_lea.vmem [#allocation13], %s551
        %p553 = scmp.lt.s32.totalorder %s35, 1
        %s554 = scalar_select %p553, %s35, 1
        %p555 = scmp.lt.s32.totalorder %s36, 1
        %s556 = scalar_select %p555, %s36, 1
        %s557 = smul.addr %s554, 2
        %s558 = sadd.s32 %s556, %s557
        %s559 = smul.addr %s558, 8
        %s560 = scalar_lea.vmem %s0, %s559
        %p561 = scmp.lt.s32.totalorder %s35, 1
        %s562 = scalar_select %p561, %s35, 1
        %s563 = smul.addr %s562, 2
        %s564 = smul.addr %s563, 8
        %s565 = scalar_lea.vmem %s1, %s564
        %p567 = scmp.eq.s32.totalorder %s36, 0
        // Predicated region
        $region93: #{tpu_custom_call.1} parent=75 // pred_check
          %p568 = pneg %p567
        $region94: #{tpu_custom_call.1} parent=75 // pred_check_branch
          %570 = sbr.rel (%p568) target = $region96
        $region95: #{tpu_custom_call.1} parent=75 // pred_region
          %v571 = vld [vmem:[%s565] sm:$0xff]
          %v572 = vld [vmem:[%s565 + $0x8] sm:$0xff]
          %v573 = vld [vmem:[%s2] sm:$0x1]
          %v574 = vld [vmem:[%s3] sm:$0x1]
          %vm575 = vcmask 261120
          %v576 = vsel %vm575, %v571, 0.0
          %577 = vadd.xlane.f32.xlu0 %v576
          %v578 = vpop.xlane.xlu0 %577
          %v579 = vsel %vm575, %v572, 0.0
          %580 = vadd.xlane.f32.xlu0 %v579
          %v581 = vpop.xlane.xlu0 %580
          %v582 = vrcp.pop 32.0
          %v583 = vmul.f32 %v578, %v582
          %v584 = vmul.f32 %v581, %v582
          %v585 = vsub.f32 %v571, %v583
          %v586 = vsub.f32 %v572, %v584
          %v587 = vmul.f32 %v585, %v585
          %v588 = vmul.f32 %v586, %v586
          %v589 = vsel %vm575, %v587, 0.0
          %590 = vadd.xlane.f32.xlu0 %v589
          %v591 = vpop.xlane.xlu0 %590
          %v592 = vsel %vm575, %v588, 0.0
          %593 = vadd.xlane.f32.xlu0 %v592
          %v594 = vpop.xlane.xlu0 %593
          %v595 = vmul.f32 %v591, %v582
          %v596 = vmul.f32 %v594, %v582
          %v597 = vadd.f32 %v595, 1e-05
          %v598 = vadd.f32 %v596, 1e-05
          %v599 = vrsqrt.pop %v597
          %v600 = vrsqrt.pop %v598
          %v601 = vmul.f32 %v585, %v599
          %v602 = vmul.f32 %v586, %v600
          %v604 = vlaneseq
          %v605 = vshrl.u32 %v604, 7
          %v606 = vsub.s32 0, %v605
          %v607 = vrot.slane %v573, %v606
          %v609 = vmul.f32 %v601, %v607
          %v610 = vmul.f32 %v602, %v607
          %v612 = vlaneseq
          %v613 = vshrl.u32 %v612, 7
          %v614 = vsub.s32 0, %v613
          %v615 = vrot.slane %v574, %v614
          %v617 = vadd.f32 %v609, %v615
          %v618 = vadd.f32 %v610, %v615
          %v619 = vpack.c.bf16 %v618, %v617
          %v620 = vld [vmem:[%s4] sm:$0xf]
          %v621 = vld [vmem:[%s4 + $0x4] sm:$0xf]
          %v622 = vld [vmem:[%s4 + $0x8] sm:$0xf]
          %v623 = vld [vmem:[%s4 + $0xc] sm:$0xf]
          %v624 = vld [vmem:[%s5] sm:$0x1]
          %v626 = vlaneseq
          %v627 = vshrl.u32 %v626, 7
          %v628 = vsub.s32 0, %v627
          %v629 = vrot.slane %v624, %v628
          %v635 = vunpack.c.l.b16 %v620
          %v636 = vunpack.c.l.b16 %v621
          %v637 = vunpack.c.l.b16 %v622
          %v638 = vunpack.c.l.b16 %v623
          %v639 = vpack.c.b16 %v636, %v635
          %v640 = vpack.c.b16 %v638, %v637
          %v644 = vsel %vm575, %v619, 0
          %646 = vmatprep.subr.bf16.mxu0 0
          %647 = vmatpush1.bf16.msra.mxu0 0
          %648 = vmatprep.subr.bf16.mxu0 0
          %649 = vmatpush1.bf16.msra.mxu0 0
          %650 = vmatprep.subr.bf16.mxu0 0
          %651 = vmatpush1.bf16.msra.mxu0 0
          %652 = vmatprep.subr.bf16.mxu0 0
          %653 = vmatpush1.bf16.msra.mxu0 0
          %654 = vmatprep.subr.bf16.mxu0 0
          %655 = vmatpush1.bf16.msra.mxu0 0
          %656 = vmatprep.subr.bf16.mxu0 0
          %657 = vmatpush1.bf16.msra.mxu0 0
          %658 = vmatprep.subr.bf16.mxu0 0
          %659 = vmatpush1.bf16.msra.mxu0 %v640
          %660 = vmatprep.subr.bf16.mxu0 0
          %661 = vmatpush1.bf16.msra.mxu0 %v639
          %662 = vmatprep.subr.bf16.mxu0 0
          %663 = vmatpush2.bf16.msra.mxu0 0
          %664 = vmatprep.subr.bf16.mxu0 0
          %665 = vmatpush2.bf16.msra.mxu0 0
          %666 = vmatprep.subr.bf16.mxu0 0
          %667 = vmatpush2.bf16.msra.mxu0 0
          %668 = vmatprep.subr.bf16.mxu0 0
          %669 = vmatpush2.bf16.msra.mxu0 0
          %670 = vmatprep.subr.bf16.mxu0 0
          %671 = vmatpush2.bf16.msra.mxu0 0
          %672 = vmatprep.subr.bf16.mxu0 0
          %673 = vmatpush2.bf16.msra.mxu0 0
          %674 = vmatprep.subr.bf16.mxu0 0
          %675 = vmatpush2.bf16.msra.mxu0 0
          %676 = vmatprep.subr.bf16.mxu0 0
          %677 = vmatpush2.bf16.msra.mxu0 0
          %678 = vmatprep.mubr.bf16.mxu0 0
          %679 = vmatmul.mubr.bf16.gmra.mxu0 %v644
          %v680 = vpop.f32.mrf.mxu0
          %v681 = vadd.f32 %v629, %v680
          %v682 = vpop.f32.mrf.mxu0
          %v683 = vpop.f32.mrf.mxu0
          %v684 = vadd.f32 %v629, %v683
          %v685 = vpop.f32.mrf.mxu0
          %686 = vdwg.mxu0
          %v687 = vmul.f32 %v681, 0.35355338
          %v688 = vmul.f32 %v684, 0.35355338
          %v689 = vpack.c.bf16 %v688, %v687
          %v691 = vunpack.c.l.b16 %v689
          %v692 = vunpack.c.h.b16 %v689
          %v693 = vpack.c.b16 %v691, %v691
          %v694 = vpack.c.b16 %v692, %v692
          %vm697 = vcmask 60416
          %698 = vst.msk [vmem:[#allocation2] sm:$0xf] %vm697, %v693
          %699 = vst.msk [vmem:[#allocation2 + $0x4] sm:$0xf] %vm697, %v694
          %v700 = vpack.c.bf16 %v684, %v681
          %v702 = vunpack.c.l.b16 %v700
          %v703 = vunpack.c.h.b16 %v700
          %v704 = vpack.c.b16 %v702, %v702
          %v705 = vpack.c.b16 %v703, %v703
          %706 = vrot.lane.b32.xlu0 %v704, 96
          %v707 = vpop.permute.xlu0 %706
          %708 = vrot.lane.b32.xlu0 %v705, 96
          %v709 = vpop.permute.xlu0 %708
          %712 = vst.msk [vmem:[#allocation3] sm:$0xf] %vm697, %v707
          %713 = vst.msk [vmem:[#allocation3 + $0x4] sm:$0xf] %vm697, %v709
          %714 = vrot.lane.b32.xlu0 %v704, 64
          %v715 = vpop.permute.xlu0 %714
          %716 = vrot.lane.b32.xlu0 %v705, 64
          %v717 = vpop.permute.xlu0 %716
          %720 = vst.msk [vmem:[#allocation4] sm:$0xf] %vm697, %v715
          %721 = vst.msk [vmem:[#allocation4 + $0x4] sm:$0xf] %vm697, %v717
          %722 = vrot.lane.b32.xlu0 %v693, 120
          %v723 = vpop.permute.xlu0 %722
          %724 = vrot.lane.b32.xlu0 %v694, 120
          %v725 = vpop.permute.xlu0 %724
          %s728 = scalar_lea.vmem [#allocation2], 8
          %729 = vst.msk [vmem:[%s728] sm:$0xf] %vm697, %v723
          %730 = vst.msk [vmem:[%s728 + $0x4] sm:$0xf] %vm697, %v725
          %731 = vrot.lane.b32.xlu0 %v704, 88
          %v732 = vpop.permute.xlu0 %731
          %733 = vrot.lane.b32.xlu0 %v705, 88
          %v734 = vpop.permute.xlu0 %733
          %s737 = scalar_lea.vmem [#allocation3], 8
          %738 = vst.msk [vmem:[%s737] sm:$0xf] %vm697, %v732
          %739 = vst.msk [vmem:[%s737 + $0x4] sm:$0xf] %vm697, %v734
          %740 = vrot.lane.b32.xlu0 %v704, 56
          %v741 = vpop.permute.xlu0 %740
          %742 = vrot.lane.b32.xlu0 %v705, 56
          %v743 = vpop.permute.xlu0 %742
          %s746 = scalar_lea.vmem [#allocation4], 8
          %747 = vst.msk [vmem:[%s746] sm:$0xf] %vm697, %v741
          %748 = vst.msk [vmem:[%s746 + $0x4] sm:$0xf] %vm697, %v743
          %749 = vrot.lane.b32.xlu0 %v693, 112
          %v750 = vpop.permute.xlu0 %749
          %751 = vrot.lane.b32.xlu0 %v694, 112
          %v752 = vpop.permute.xlu0 %751
          %s755 = scalar_lea.vmem [#allocation2], 16
          %756 = vst.msk [vmem:[%s755] sm:$0xf] %vm697, %v750
          %757 = vst.msk [vmem:[%s755 + $0x4] sm:$0xf] %vm697, %v752
          %758 = vrot.lane.b32.xlu0 %v704, 80
          %v759 = vpop.permute.xlu0 %758
          %760 = vrot.lane.b32.xlu0 %v705, 80
          %v761 = vpop.permute.xlu0 %760
          %s764 = scalar_lea.vmem [#allocation3], 16
          %765 = vst.msk [vmem:[%s764] sm:$0xf] %vm697, %v759
          %766 = vst.msk [vmem:[%s764 + $0x4] sm:$0xf] %vm697, %v761
          %767 = vrot.lane.b32.xlu0 %v704, 48
          %v768 = vpop.permute.xlu0 %767
          %769 = vrot.lane.b32.xlu0 %v705, 48
          %v770 = vpop.permute.xlu0 %769
          %s773 = scalar_lea.vmem [#allocation4], 16
          %774 = vst.msk [vmem:[%s773] sm:$0xf] %vm697, %v768
          %775 = vst.msk [vmem:[%s773 + $0x4] sm:$0xf] %vm697, %v770
          %776 = vrot.lane.b32.xlu0 %v693, 104
          %v777 = vpop.permute.xlu0 %776
          %778 = vrot.lane.b32.xlu0 %v694, 104
          %v779 = vpop.permute.xlu0 %778
          %s782 = scalar_lea.vmem [#allocation2], 24
          %783 = vst.msk [vmem:[%s782] sm:$0xf] %vm697, %v777
          %784 = vst.msk [vmem:[%s782 + $0x4] sm:$0xf] %vm697, %v779
          %785 = vrot.lane.b32.xlu0 %v704, 72
          %v786 = vpop.permute.xlu0 %785
          %787 = vrot.lane.b32.xlu0 %v705, 72
          %v788 = vpop.permute.xlu0 %787
          %s791 = scalar_lea.vmem [#allocation3], 24
          %792 = vst.msk [vmem:[%s791] sm:$0xf] %vm697, %v786
          %793 = vst.msk [vmem:[%s791 + $0x4] sm:$0xf] %vm697, %v788
          %794 = vrot.lane.b32.xlu0 %v704, 40
          %v795 = vpop.permute.xlu0 %794
          %796 = vrot.lane.b32.xlu0 %v705, 40
          %v797 = vpop.permute.xlu0 %796
          %s800 = scalar_lea.vmem [#allocation4], 24
          %801 = vst.msk [vmem:[%s800] sm:$0xf] %vm697, %v795
          %802 = vst.msk [vmem:[%s800 + $0x4] sm:$0xf] %vm697, %v797
        $region96: #{tpu_custom_call.1} parent=75 // pred_fallthru
          _
        %v803 = vld [vmem:[%s560] sm:$0xff]
        %s804 = smul.u32 %s36, 8
        %s805 = sshra.s32 %s804, 3
        %s806 = sand.u32 %s804, 7
        %s807 = smul.addr %s805, 4
        %s808 = scalar_lea.vmem [#allocation2], %s807
        %v809 = vld [vmem:[%s808] sm:$0xf]
        %v810 = vld [vmem:[%s808 + $0x8] sm:$0xf]
        %v811 = vld [vmem:[%s808 + $0x10] sm:$0xf]
        %v812 = vld [vmem:[%s808 + $0x18] sm:$0xf]
        %v813 = vld [vmem:[#allocation3] sm:$0xf]
        %v814 = vld [vmem:[#allocation3 + $0x4] sm:$0xf]
        %v815 = vld [vmem:[#allocation3 + $0x8] sm:$0xf]
        %v816 = vld [vmem:[#allocation3 + $0xc] sm:$0xf]
        %v817 = vld [vmem:[#allocation3 + $0x10] sm:$0xf]
        %v818 = vld [vmem:[#allocation3 + $0x14] sm:$0xf]
        %v819 = vld [vmem:[#allocation3 + $0x18] sm:$0xf]
        %v820 = vld [vmem:[#allocation3 + $0x1c] sm:$0xf]
        %v821 = vld [vmem:[#allocation4] sm:$0xf]
        %v822 = vld [vmem:[#allocation4 + $0x4] sm:$0xf]
        %v823 = vld [vmem:[#allocation4 + $0x8] sm:$0xf]
        %v824 = vld [vmem:[#allocation4 + $0xc] sm:$0xf]
        %v825 = vld [vmem:[#allocation4 + $0x10] sm:$0xf]
        %v826 = vld [vmem:[#allocation4 + $0x14] sm:$0xf]
        %v827 = vld [vmem:[#allocation4 + $0x18] sm:$0xf]
        %v828 = vld [vmem:[#allocation4 + $0x1c] sm:$0xf]
        %v831 = vunpack.c.l.b16 %v813
        %v832 = vunpack.c.l.b16 %v814
        %v833 = vpack.c.b16 %v832, %v831
        %vm834 = vcmask 64512
        %v836 = vsel %vm834, %v809, 0
        %v839 = vsel %vm834, %v833, 0
        %841 = vmatprep.subr.bf16.mxu0 0
        %842 = vmatpush1.bf16.xpose.msra.mxu0 0
        %843 = vmatprep.subr.bf16.mxu0 0
        %844 = vmatpush1.bf16.xpose.msra.mxu0 0
        %845 = vmatprep.subr.bf16.mxu0 0
        %846 = vmatpush1.bf16.xpose.msra.mxu0 0
        %847 = vmatprep.subr.bf16.mxu0 0
        %848 = vmatpush1.bf16.xpose.msra.mxu0 0
        %849 = vmatprep.subr.bf16.mxu0 0
        %850 = vmatpush1.bf16.xpose.msra.mxu0 0
        %851 = vmatprep.subr.bf16.mxu0 0
        %852 = vmatpush1.bf16.xpose.msra.mxu0 0
        %853 = vmatprep.subr.bf16.mxu0 0
        %854 = vmatpush1.bf16.xpose.msra.mxu0 0
        %855 = vmatprep.subr.bf16.mxu0 0
        %856 = vmatpush1.bf16.xpose.msra.mxu0 %v839
        %857 = vmatprep.subr.bf16.mxu0 0
        %858 = vmatpush2.bf16.xpose.msra.mxu0 0
        %859 = vmatprep.subr.bf16.mxu0 0
        %860 = vmatpush2.bf16.xpose.msra.mxu0 0
        %861 = vmatprep.subr.bf16.mxu0 0
        %862 = vmatpush2.bf16.xpose.msra.mxu0 0
        %863 = vmatprep.subr.bf16.mxu0 0
        %864 = vmatpush2.bf16.xpose.msra.mxu0 0
        %865 = vmatprep.subr.bf16.mxu0 0
        %866 = vmatpush2.bf16.xpose.msra.mxu0 0
        %867 = vmatprep.subr.bf16.mxu0 0
        %868 = vmatpush2.bf16.xpose.msra.mxu0 0
        %869 = vmatprep.subr.bf16.mxu0 0
        %870 = vmatpush2.bf16.xpose.msra.mxu0 0
        %871 = vmatprep.subr.bf16.mxu0 0
        %872 = vmatpush2.bf16.xpose.msra.mxu0 0
        %873 = vmatprep.mubr.bf16.mxu0 0
        %874 = vmatmul.mubr.bf16.gmra.mxu0 %v836
        %v875 = vpop.f32.mrf.mxu0
        %v876 = vadd.f32 0.0, %v875
        %v877 = vpop.f32.mrf.mxu0
        %v878 = vpop.f32.mrf.mxu0
        %v879 = vpop.f32.mrf.mxu0
        %880 = vdwg.mxu0
        %v883 = vunpack.c.l.b16 %v815
        %v884 = vunpack.c.l.b16 %v816
        %v885 = vpack.c.b16 %v884, %v883
        %v887 = vsel %vm834, %v810, 0
        %v890 = vsel %vm834, %v885, 0
        %892 = vmatprep.subr.bf16.mxu0 0
        %893 = vmatpush1.bf16.xpose.msra.mxu0 0
        %894 = vmatprep.subr.bf16.mxu0 0
        %895 = vmatpush1.bf16.xpose.msra.mxu0 0
        %896 = vmatprep.subr.bf16.mxu0 0
        %897 = vmatpush1.bf16.xpose.msra.mxu0 0
        %898 = vmatprep.subr.bf16.mxu0 0
        %899 = vmatpush1.bf16.xpose.msra.mxu0 0
        %900 = vmatprep.subr.bf16.mxu0 0
        %901 = vmatpush1.bf16.xpose.msra.mxu0 0
        %902 = vmatprep.subr.bf16.mxu0 0
        %903 = vmatpush1.bf16.xpose.msra.mxu0 0
        %904 = vmatprep.subr.bf16.mxu0 0
        %905 = vmatpush1.bf16.xpose.msra.mxu0 0
        %906 = vmatprep.subr.bf16.mxu0 0
        %907 = vmatpush1.bf16.xpose.msra.mxu0 %v890
        %908 = vmatprep.subr.bf16.mxu0 0
        %909 = vmatpush2.bf16.xpose.msra.mxu0 0
        %910 = vmatprep.subr.bf16.mxu0 0
        %911 = vmatpush2.bf16.xpose.msra.mxu0 0
        %912 = vmatprep.subr.bf16.mxu0 0
        %913 = vmatpush2.bf16.xpose.msra.mxu0 0
        %914 = vmatprep.subr.bf16.mxu0 0
        %915 = vmatpush2.bf16.xpose.msra.mxu0 0
        %916 = vmatprep.subr.bf16.mxu0 0
        %917 = vmatpush2.bf16.xpose.msra.mxu0 0
        %918 = vmatprep.subr.bf16.mxu0 0
        %919 = vmatpush2.bf16.xpose.msra.mxu0 0
        %920 = vmatprep.subr.bf16.mxu0 0
        %921 = vmatpush2.bf16.xpose.msra.mxu0 0
        %922 = vmatprep.subr.bf16.mxu0 0
        %923 = vmatpush2.bf16.xpose.msra.mxu0 0
        %924 = vmatprep.mubr.bf16.mxu0 0
        %925 = vmatmul.mubr.bf16.gmra.mxu0 %v887
        %v926 = vpop.f32.mrf.mxu0
        %v927 = vadd.f32 0.0, %v926
        %v928 = vpop.f32.mrf.mxu0
        %v929 = vpop.f32.mrf.mxu0
        %v930 = vpop.f32.mrf.mxu0
        %931 = vdwg.mxu0
        %v934 = vunpack.c.l.b16 %v817
        %v935 = vunpack.c.l.b16 %v818
        %v936 = vpack.c.b16 %v935, %v934
        %v938 = vsel %vm834, %v811, 0
        %v941 = vsel %vm834, %v936, 0
        %943 = vmatprep.subr.bf16.mxu0 0
        %944 = vmatpush1.bf16.xpose.msra.mxu0 0
        %945 = vmatprep.subr.bf16.mxu0 0
        %946 = vmatpush1.bf16.xpose.msra.mxu0 0
        %947 = vmatprep.subr.bf16.mxu0 0
        %948 = vmatpush1.bf16.xpose.msra.mxu0 0
        %949 = vmatprep.subr.bf16.mxu0 0
        %950 = vmatpush1.bf16.xpose.msra.mxu0 0
        %951 = vmatprep.subr.bf16.mxu0 0
        %952 = vmatpush1.bf16.xpose.msra.mxu0 0
        %953 = vmatprep.subr.bf16.mxu0 0
        %954 = vmatpush1.bf16.xpose.msra.mxu0 0
        %955 = vmatprep.subr.bf16.mxu0 0
        %956 = vmatpush1.bf16.xpose.msra.mxu0 0
        %957 = vmatprep.subr.bf16.mxu0 0
        %958 = vmatpush1.bf16.xpose.msra.mxu0 %v941
        %959 = vmatprep.subr.bf16.mxu0 0
        %960 = vmatpush2.bf16.xpose.msra.mxu0 0
        %961 = vmatprep.subr.bf16.mxu0 0
        %962 = vmatpush2.bf16.xpose.msra.mxu0 0
        %963 = vmatprep.subr.bf16.mxu0 0
        %964 = vmatpush2.bf16.xpose.msra.mxu0 0
        %965 = vmatprep.subr.bf16.mxu0 0
        %966 = vmatpush2.bf16.xpose.msra.mxu0 0
        %967 = vmatprep.subr.bf16.mxu0 0
        %968 = vmatpush2.bf16.xpose.msra.mxu0 0
        %969 = vmatprep.subr.bf16.mxu0 0
        %970 = vmatpush2.bf16.xpose.msra.mxu0 0
        %971 = vmatprep.subr.bf16.mxu0 0
        %972 = vmatpush2.bf16.xpose.msra.mxu0 0
        %973 = vmatprep.subr.bf16.mxu0 0
        %974 = vmatpush2.bf16.xpose.msra.mxu0 0
        %975 = vmatprep.mubr.bf16.mxu0 0
        %976 = vmatmul.mubr.bf16.gmra.mxu0 %v938
        %v977 = vpop.f32.mrf.mxu0
        %v978 = vadd.f32 0.0, %v977
        %v979 = vpop.f32.mrf.mxu0
        %v980 = vpop.f32.mrf.mxu0
        %v981 = vpop.f32.mrf.mxu0
        %982 = vdwg.mxu0
        %v985 = vunpack.c.l.b16 %v819
        %v986 = vunpack.c.l.b16 %v820
        %v987 = vpack.c.b16 %v986, %v985
        %v989 = vsel %vm834, %v812, 0
        %v992 = vsel %vm834, %v987, 0
        %994 = vmatprep.subr.bf16.mxu0 0
        %995 = vmatpush1.bf16.xpose.msra.mxu0 0
        %996 = vmatprep.subr.bf16.mxu0 0
        %997 = vmatpush1.bf16.xpose.msra.mxu0 0
        %998 = vmatprep.subr.bf16.mxu0 0
        %999 = vmatpush1.bf16.xpose.msra.mxu0 0
        %1000 = vmatprep.subr.bf16.mxu0 0
        %1001 = vmatpush1.bf16.xpose.msra.mxu0 0
        %1002 = vmatprep.subr.bf16.mxu0 0
        %1003 = vmatpush1.bf16.xpose.msra.mxu0 0
        %1004 = vmatprep.subr.bf16.mxu0 0
        %1005 = vmatpush1.bf16.xpose.msra.mxu0 0
        %1006 = vmatprep.subr.bf16.mxu0 0
        %1007 = vmatpush1.bf16.xpose.msra.mxu0 0
        %1008 = vmatprep.subr.bf16.mxu0 0
        %1009 = vmatpush1.bf16.xpose.msra.mxu0 %v992
        %1010 = vmatprep.subr.bf16.mxu0 0
        %1011 = vmatpush2.bf16.xpose.msra.mxu0 0
        %1012 = vmatprep.subr.bf16.mxu0 0
        %1013 = vmatpush2.bf16.xpose.msra.mxu0 0
        %1014 = vmatprep.subr.bf16.mxu0 0
        %1015 = vmatpush2.bf16.xpose.msra.mxu0 0
        %1016 = vmatprep.subr.bf16.mxu0 0
        %1017 = vmatpush2.bf16.xpose.msra.mxu0 0
        %1018 = vmatprep.subr.bf16.mxu0 0
        %1019 = vmatpush2.bf16.xpose.msra.mxu0 0
        %1020 = vmatprep.subr.bf16.mxu0 0
        %1021 = vmatpush2.bf16.xpose.msra.mxu0 0
        %1022 = vmatprep.subr.bf16.mxu0 0
        %1023 = vmatpush2.bf16.xpose.msra.mxu0 0
        %1024 = vmatprep.subr.bf16.mxu0 0
        %1025 = vmatpush2.bf16.xpose.msra.mxu0 0
        %1026 = vmatprep.mubr.bf16.mxu0 0
        %1027 = vmatmul.mubr.bf16.gmra.mxu0 %v989
        %v1028 = vpop.f32.mrf.mxu0
        %v1029 = vadd.f32 0.0, %v1028
        %v1030 = vpop.f32.mrf.mxu0
        %v1031 = vpop.f32.mrf.mxu0
        %v1032 = vpop.f32.mrf.mxu0
        %1033 = vdwg.mxu0
        %vm1034 = vcmask 130048
        %v1035 = vsel %vm1034, %v876, -inf
        %1036 = vmax.xlane.f32.xlu0 %v1035
        %v1037 = vpop.xlane.xlu0 %1036
        %v1038 = vsel %vm1034, %v927, -inf
        %1039 = vmax.xlane.f32.xlu0 %v1038
        %v1040 = vpop.xlane.xlu0 %1039
        %v1041 = vsel %vm1034, %v978, -inf
        %1042 = vmax.xlane.f32.xlu0 %v1041
        %v1043 = vpop.xlane.xlu0 %1042
        %v1044 = vsel %vm1034, %v1029, -inf
        %1045 = vmax.xlane.f32.xlu0 %v1044
        %v1046 = vpop.xlane.xlu0 %1045
        %v1047 = vsub.f32 %v876, %v1037
        %v1048 = vsub.f32 %v927, %v1040
        %v1049 = vsub.f32 %v978, %v1043
        %v1050 = vsub.f32 %v1029, %v1046
        %v1051 = vmul.f32 %v1047, 1.442695
        %v1052 = vpow.pop %v1051
        %v1053 = vmul.f32 %v1048, 1.442695
        %v1054 = vpow.pop %v1053
        %v1055 = vmul.f32 %v1049, 1.442695
        %v1056 = vpow.pop %v1055
        %v1057 = vmul.f32 %v1050, 1.442695
        %v1058 = vpow.pop %v1057
        %v1059 = vsel %vm1034, %v1052, 0.0
        %1060 = vadd.xlane.f32.xlu0 %v1059
        %v1061 = vpop.xlane.xlu0 %1060
        %v1062 = vsel %vm1034, %v1054, 0.0
        %1063 = vadd.xlane.f32.xlu0 %v1062
        %v1064 = vpop.xlane.xlu0 %1063
        %v1065 = vsel %vm1034, %v1056, 0.0
        %1066 = vadd.xlane.f32.xlu0 %v1065
        %v1067 = vpop.xlane.xlu0 %1066
        %v1068 = vsel %vm1034, %v1058, 0.0
        %1069 = vadd.xlane.f32.xlu0 %v1068
        %v1070 = vpop.xlane.xlu0 %1069
        %v1071 = vrcp.pop %v1061
        %v1072 = vrcp.pop %v1064
        %v1073 = vrcp.pop %v1067
        %v1074 = vrcp.pop %v1070
        %v1075 = vmul.f32 %v1052, %v1071
        %v1076 = vmul.f32 %v1054, %v1072
        %v1077 = vmul.f32 %v1056, %v1073
        %v1078 = vmul.f32 %v1058, %v1074
        %v1079 = vpack.c.bf16 %v1075, %v1075
        %v1080 = vpack.c.bf16 %v1076, %v1076
        %v1081 = vpack.c.bf16 %v1077, %v1077
        %v1082 = vpack.c.bf16 %v1078, %v1078
        %v1085 = vunpack.c.l.b16 %v821
        %v1086 = vunpack.c.l.b16 %v822
        %v1087 = vpack.c.b16 %v1086, %v1085
        %v1090 = vsel %vm1034, %v1079, 0
        %1092 = vmatprep.subr.bf16.mxu0 0
        %1093 = vmatpush1.bf16.msra.mxu0 0
        %1094 = vmatprep.subr.bf16.mxu0 0
        %1095 = vmatpush1.bf16.msra.mxu0 0
        %1096 = vmatprep.subr.bf16.mxu0 0
        %1097 = vmatpush1.bf16.msra.mxu0 0
        %1098 = vmatprep.subr.bf16.mxu0 0
        %1099 = vmatpush1.bf16.msra.mxu0 0
        %1100 = vmatprep.subr.bf16.mxu0 0
        %1101 = vmatpush1.bf16.msra.mxu0 0
        %1102 = vmatprep.subr.bf16.mxu0 0
        %1103 = vmatpush1.bf16.msra.mxu0 0
        %1104 = vmatprep.subr.bf16.mxu0 0
        %1105 = vmatpush1.bf16.msra.mxu0 0
        %1106 = vmatprep.subr.bf16.mxu0 0
        %1107 = vmatpush1.bf16.msra.mxu0 %v1087
        %1108 = vmatprep.subr.bf16.mxu0 0
        %1109 = vmatpush2.bf16.msra.mxu0 0
        %1110 = vmatprep.subr.bf16.mxu0 0
        %1111 = vmatpush2.bf16.msra.mxu0 0
        %1112 = vmatprep.subr.bf16.mxu0 0
        %1113 = vmatpush2.bf16.msra.mxu0 0
        %1114 = vmatprep.subr.bf16.mxu0 0
        %1115 = vmatpush2.bf16.msra.mxu0 0
        %1116 = vmatprep.subr.bf16.mxu0 0
        %1117 = vmatpush2.bf16.msra.mxu0 0
        %1118 = vmatprep.subr.bf16.mxu0 0
        %1119 = vmatpush2.bf16.msra.mxu0 0
        %1120 = vmatprep.subr.bf16.mxu0 0
        %1121 = vmatpush2.bf16.msra.mxu0 0
        %1122 = vmatprep.subr.bf16.mxu0 0
        %1123 = vmatpush2.bf16.msra.mxu0 0
        %1124 = vmatprep.mubr.bf16.mxu0 0
        %1125 = vmatmul.mubr.bf16.gmra.mxu0 %v1090
        %v1126 = vpop.f32.mrf.mxu0
        %v1127 = vadd.f32 0.0, %v1126
        %v1128 = vpop.f32.mrf.mxu0
        %v1129 = vpop.f32.mrf.mxu0
        %v1130 = vpop.f32.mrf.mxu0
        %1131 = vdwg.mxu0
        %v1134 = vunpack.c.l.b16 %v823
        %v1135 = vunpack.c.l.b16 %v824
        %v1136 = vpack.c.b16 %v1135, %v1134
        %v1139 = vsel %vm1034, %v1080, 0
        %1141 = vmatprep.subr.bf16.mxu0 0
        %1142 = vmatpush1.bf16.msra.mxu0 0
        %1143 = vmatprep.subr.bf16.mxu0 0
        %1144 = vmatpush1.bf16.msra.mxu0 0
        %1145 = vmatprep.subr.bf16.mxu0 0
        %1146 = vmatpush1.bf16.msra.mxu0 0
        %1147 = vmatprep.subr.bf16.mxu0 0
        %1148 = vmatpush1.bf16.msra.mxu0 0
        %1149 = vmatprep.subr.bf16.mxu0 0
        %1150 = vmatpush1.bf16.msra.mxu0 0
        %1151 = vmatprep.subr.bf16.mxu0 0
        %1152 = vmatpush1.bf16.msra.mxu0 0
        %1153 = vmatprep.subr.bf16.mxu0 0
        %1154 = vmatpush1.bf16.msra.mxu0 0
        %1155 = vmatprep.subr.bf16.mxu0 0
        %1156 = vmatpush1.bf16.msra.mxu0 %v1136
        %1157 = vmatprep.subr.bf16.mxu0 0
        %1158 = vmatpush2.bf16.msra.mxu0 0
        %1159 = vmatprep.subr.bf16.mxu0 0
        %1160 = vmatpush2.bf16.msra.mxu0 0
        %1161 = vmatprep.subr.bf16.mxu0 0
        %1162 = vmatpush2.bf16.msra.mxu0 0
        %1163 = vmatprep.subr.bf16.mxu0 0
        %1164 = vmatpush2.bf16.msra.mxu0 0
        %1165 = vmatprep.subr.bf16.mxu0 0
        %1166 = vmatpush2.bf16.msra.mxu0 0
        %1167 = vmatprep.subr.bf16.mxu0 0
        %1168 = vmatpush2.bf16.msra.mxu0 0
        %1169 = vmatprep.subr.bf16.mxu0 0
        %1170 = vmatpush2.bf16.msra.mxu0 0
        %1171 = vmatprep.subr.bf16.mxu0 0
        %1172 = vmatpush2.bf16.msra.mxu0 0
        %1173 = vmatprep.mubr.bf16.mxu0 0
        %1174 = vmatmul.mubr.bf16.gmra.mxu0 %v1139
        %v1175 = vpop.f32.mrf.mxu0
        %v1176 = vadd.f32 0.0, %v1175
        %v1177 = vpop.f32.mrf.mxu0
        %v1178 = vpop.f32.mrf.mxu0
        %v1179 = vpop.f32.mrf.mxu0
        %1180 = vdwg.mxu0
        %v1183 = vunpack.c.l.b16 %v825
        %v1184 = vunpack.c.l.b16 %v826
        %v1185 = vpack.c.b16 %v1184, %v1183
        %v1188 = vsel %vm1034, %v1081, 0
        %1190 = vmatprep.subr.bf16.mxu0 0
        %1191 = vmatpush1.bf16.msra.mxu0 0
        %1192 = vmatprep.subr.bf16.mxu0 0
        %1193 = vmatpush1.bf16.msra.mxu0 0
        %1194 = vmatprep.subr.bf16.mxu0 0
        %1195 = vmatpush1.bf16.msra.mxu0 0
        %1196 = vmatprep.subr.bf16.mxu0 0
        %1197 = vmatpush1.bf16.msra.mxu0 0
        %1198 = vmatprep.subr.bf16.mxu0 0
        %1199 = vmatpush1.bf16.msra.mxu0 0
        %1200 = vmatprep.subr.bf16.mxu0 0
        %1201 = vmatpush1.bf16.msra.mxu0 0
        %1202 = vmatprep.subr.bf16.mxu0 0
        %1203 = vmatpush1.bf16.msra.mxu0 0
        %1204 = vmatprep.subr.bf16.mxu0 0
        %1205 = vmatpush1.bf16.msra.mxu0 %v1185
        %1206 = vmatprep.subr.bf16.mxu0 0
        %1207 = vmatpush2.bf16.msra.mxu0 0
        %1208 = vmatprep.subr.bf16.mxu0 0
        %1209 = vmatpush2.bf16.msra.mxu0 0
        %1210 = vmatprep.subr.bf16.mxu0 0
        %1211 = vmatpush2.bf16.msra.mxu0 0
        %1212 = vmatprep.subr.bf16.mxu0 0
        %1213 = vmatpush2.bf16.msra.mxu0 0
        %1214 = vmatprep.subr.bf16.mxu0 0
        %1215 = vmatpush2.bf16.msra.mxu0 0
        %1216 = vmatprep.subr.bf16.mxu0 0
        %1217 = vmatpush2.bf16.msra.mxu0 0
        %1218 = vmatprep.subr.bf16.mxu0 0
        %1219 = vmatpush2.bf16.msra.mxu0 0
        %1220 = vmatprep.subr.bf16.mxu0 0
        %1221 = vmatpush2.bf16.msra.mxu0 0
        %1222 = vmatprep.mubr.bf16.mxu0 0
        %1223 = vmatmul.mubr.bf16.gmra.mxu0 %v1188
        %v1224 = vpop.f32.mrf.mxu0
        %v1225 = vadd.f32 0.0, %v1224
        %v1226 = vpop.f32.mrf.mxu0
        %v1227 = vpop.f32.mrf.mxu0
        %v1228 = vpop.f32.mrf.mxu0
        %1229 = vdwg.mxu0
        %v1232 = vunpack.c.l.b16 %v827
        %v1233 = vunpack.c.l.b16 %v828
        %v1234 = vpack.c.b16 %v1233, %v1232
        %v1237 = vsel %vm1034, %v1082, 0
        %1239 = vmatprep.subr.bf16.mxu0 0
        %1240 = vmatpush1.bf16.msra.mxu0 0
        %1241 = vmatprep.subr.bf16.mxu0 0
        %1242 = vmatpush1.bf16.msra.mxu0 0
        %1243 = vmatprep.subr.bf16.mxu0 0
        %1244 = vmatpush1.bf16.msra.mxu0 0
        %1245 = vmatprep.subr.bf16.mxu0 0
        %1246 = vmatpush1.bf16.msra.mxu0 0
        %1247 = vmatprep.subr.bf16.mxu0 0
        %1248 = vmatpush1.bf16.msra.mxu0 0
        %1249 = vmatprep.subr.bf16.mxu0 0
        %1250 = vmatpush1.bf16.msra.mxu0 0
        %1251 = vmatprep.subr.bf16.mxu0 0
        %1252 = vmatpush1.bf16.msra.mxu0 0
        %1253 = vmatprep.subr.bf16.mxu0 0
        %1254 = vmatpush1.bf16.msra.mxu0 %v1234
        %1255 = vmatprep.subr.bf16.mxu0 0
        %1256 = vmatpush2.bf16.msra.mxu0 0
        %1257 = vmatprep.subr.bf16.mxu0 0
        %1258 = vmatpush2.bf16.msra.mxu0 0
        %1259 = vmatprep.subr.bf16.mxu0 0
        %1260 = vmatpush2.bf16.msra.mxu0 0
        %1261 = vmatprep.subr.bf16.mxu0 0
        %1262 = vmatpush2.bf16.msra.mxu0 0
        %1263 = vmatprep.subr.bf16.mxu0 0
        %1264 = vmatpush2.bf16.msra.mxu0 0
        %1265 = vmatprep.subr.bf16.mxu0 0
        %1266 = vmatpush2.bf16.msra.mxu0 0
        %1267 = vmatprep.subr.bf16.mxu0 0
        %1268 = vmatpush2.bf16.msra.mxu0 0
        %1269 = vmatprep.subr.bf16.mxu0 0
        %1270 = vmatpush2.bf16.msra.mxu0 0
        %1271 = vmatprep.mubr.bf16.mxu0 0
        %1272 = vmatmul.mubr.bf16.gmra.mxu0 %v1237
        %v1273 = vpop.f32.mrf.mxu0
        %v1274 = vadd.f32 0.0, %v1273
        %v1275 = vpop.f32.mrf.mxu0
        %v1276 = vpop.f32.mrf.mxu0
        %v1277 = vpop.f32.mrf.mxu0
        %1278 = vdwg.mxu0
        %v1279 = vpack.c.bf16 %v1127, %v1127
        %v1280 = vpack.c.bf16 %v1176, %v1176
        %v1281 = vpack.c.bf16 %v1225, %v1225
        %v1282 = vpack.c.bf16 %v1274, %v1274
        %v1283 = vld [vmem:[#allocation5] sm:$0xf]
        %v1284 = vld [vmem:[#allocation5 + $0x4] sm:$0xf]
        %v1285 = vld [vmem:[#allocation5 + $0x8] sm:$0xf]
        %v1286 = vld [vmem:[#allocation5 + $0xc] sm:$0xf]
        %v1288 = vsel %vm834, %v1279, 0
        %vm1290 = vcmask 1043456
        %v1292 = vsel %vm1290, %v1283, 0
        %1294 = vmatprep.subr.bf16.mxu0 0
        %1295 = vmatpush1.bf16.msra.mxu0 0
        %1296 = vmatprep.subr.bf16.mxu0 0
        %1297 = vmatpush1.bf16.msra.mxu0 0
        %1298 = vmatprep.subr.bf16.mxu0 0
        %1299 = vmatpush1.bf16.msra.mxu0 0
        %1300 = vmatprep.subr.bf16.mxu0 0
        %1301 = vmatpush1.bf16.msra.mxu0 0
        %1302 = vmatprep.subr.bf16.mxu0 0
        %1303 = vmatpush1.bf16.msra.mxu0 0
        %1304 = vmatprep.subr.bf16.mxu0 0
        %1305 = vmatpush1.bf16.msra.mxu0 0
        %1306 = vmatprep.subr.bf16.mxu0 0
        %1307 = vmatpush1.bf16.msra.mxu0 0
        %1308 = vmatprep.subr.bf16.mxu0 0
        %1309 = vmatpush1.bf16.msra.mxu0 %v1292
        %1310 = vmatprep.subr.bf16.mxu0 0
        %1311 = vmatpush2.bf16.msra.mxu0 0
        %1312 = vmatprep.subr.bf16.mxu0 0
        %1313 = vmatpush2.bf16.msra.mxu0 0
        %1314 = vmatprep.subr.bf16.mxu0 0
        %1315 = vmatpush2.bf16.msra.mxu0 0
        %1316 = vmatprep.subr.bf16.mxu0 0
        %1317 = vmatpush2.bf16.msra.mxu0 0
        %1318 = vmatprep.subr.bf16.mxu0 0
        %1319 = vmatpush2.bf16.msra.mxu0 0
        %1320 = vmatprep.subr.bf16.mxu0 0
        %1321 = vmatpush2.bf16.msra.mxu0 0
        %1322 = vmatprep.subr.bf16.mxu0 0
        %1323 = vmatpush2.bf16.msra.mxu0 0
        %1324 = vmatprep.subr.bf16.mxu0 0
        %1325 = vmatpush2.bf16.msra.mxu0 0
        %1326 = vmatprep.mubr.bf16.mxu0 0
        %1327 = vmatmul.mubr.bf16.gmra.mxu0 %v1288
        %v1328 = vpop.f32.mrf.mxu0
        %v1329 = vadd.f32 0.0, %v1328
        %v1330 = vpop.f32.mrf.mxu0
        %v1331 = vpop.f32.mrf.mxu0
        %v1332 = vpop.f32.mrf.mxu0
        %1333 = vdwg.mxu0
        %v1335 = vsel %vm834, %v1280, 0
        %v1338 = vsel %vm1290, %v1284, 0
        %1340 = vmatprep.subr.bf16.mxu0 0
        %1341 = vmatpush1.bf16.msra.mxu0 0
        %1342 = vmatprep.subr.bf16.mxu0 0
        %1343 = vmatpush1.bf16.msra.mxu0 0
        %1344 = vmatprep.subr.bf16.mxu0 0
        %1345 = vmatpush1.bf16.msra.mxu0 0
        %1346 = vmatprep.subr.bf16.mxu0 0
        %1347 = vmatpush1.bf16.msra.mxu0 0
        %1348 = vmatprep.subr.bf16.mxu0 0
        %1349 = vmatpush1.bf16.msra.mxu0 0
        %1350 = vmatprep.subr.bf16.mxu0 0
        %1351 = vmatpush1.bf16.msra.mxu0 0
        %1352 = vmatprep.subr.bf16.mxu0 0
        %1353 = vmatpush1.bf16.msra.mxu0 0
        %1354 = vmatprep.subr.bf16.mxu0 0
        %1355 = vmatpush1.bf16.msra.mxu0 %v1338
        %1356 = vmatprep.subr.bf16.mxu0 0
        %1357 = vmatpush2.bf16.msra.mxu0 0
        %1358 = vmatprep.subr.bf16.mxu0 0
        %1359 = vmatpush2.bf16.msra.mxu0 0
        %1360 = vmatprep.subr.bf16.mxu0 0
        %1361 = vmatpush2.bf16.msra.mxu0 0
        %1362 = vmatprep.subr.bf16.mxu0 0
        %1363 = vmatpush2.bf16.msra.mxu0 0
        %1364 = vmatprep.subr.bf16.mxu0 0
        %1365 = vmatpush2.bf16.msra.mxu0 0
        %1366 = vmatprep.subr.bf16.mxu0 0
        %1367 = vmatpush2.bf16.msra.mxu0 0
        %1368 = vmatprep.subr.bf16.mxu0 0
        %1369 = vmatpush2.bf16.msra.mxu0 0
        %1370 = vmatprep.subr.bf16.mxu0 0
        %1371 = vmatpush2.bf16.msra.mxu0 0
        %1372 = vmatprep.mubr.bf16.mxu0 0
        %1373 = vmatmul.mubr.bf16.gmra.mxu0 %v1335
        %v1374 = vpop.f32.mrf.mxu0
        %v1375 = vadd.f32 0.0, %v1374
        %v1376 = vpop.f32.mrf.mxu0
        %v1377 = vpop.f32.mrf.mxu0
        %v1378 = vpop.f32.mrf.mxu0
        %1379 = vdwg.mxu0
        %v1381 = vsel %vm834, %v1281, 0
        %v1384 = vsel %vm1290, %v1285, 0
        %1386 = vmatprep.subr.bf16.mxu0 0
        %1387 = vmatpush1.bf16.msra.mxu0 0
        %1388 = vmatprep.subr.bf16.mxu0 0
        %1389 = vmatpush1.bf16.msra.mxu0 0
        %1390 = vmatprep.subr.bf16.mxu0 0
        %1391 = vmatpush1.bf16.msra.mxu0 0
        %1392 = vmatprep.subr.bf16.mxu0 0
        %1393 = vmatpush1.bf16.msra.mxu0 0
        %1394 = vmatprep.subr.bf16.mxu0 0
        %1395 = vmatpush1.bf16.msra.mxu0 0
        %1396 = vmatprep.subr.bf16.mxu0 0
        %1397 = vmatpush1.bf16.msra.mxu0 0
        %1398 = vmatprep.subr.bf16.mxu0 0
        %1399 = vmatpush1.bf16.msra.mxu0 0
        %1400 = vmatprep.subr.bf16.mxu0 0
        %1401 = vmatpush1.bf16.msra.mxu0 %v1384
        %1402 = vmatprep.subr.bf16.mxu0 0
        %1403 = vmatpush2.bf16.msra.mxu0 0
        %1404 = vmatprep.subr.bf16.mxu0 0
        %1405 = vmatpush2.bf16.msra.mxu0 0
        %1406 = vmatprep.subr.bf16.mxu0 0
        %1407 = vmatpush2.bf16.msra.mxu0 0
        %1408 = vmatprep.subr.bf16.mxu0 0
        %1409 = vmatpush2.bf16.msra.mxu0 0
        %1410 = vmatprep.subr.bf16.mxu0 0
        %1411 = vmatpush2.bf16.msra.mxu0 0
        %1412 = vmatprep.subr.bf16.mxu0 0
        %1413 = vmatpush2.bf16.msra.mxu0 0
        %1414 = vmatprep.subr.bf16.mxu0 0
        %1415 = vmatpush2.bf16.msra.mxu0 0
        %1416 = vmatprep.subr.bf16.mxu0 0
        %1417 = vmatpush2.bf16.msra.mxu0 0
        %1418 = vmatprep.mubr.bf16.mxu0 0
        %1419 = vmatmul.mubr.bf16.gmra.mxu0 %v1381
        %v1420 = vpop.f32.mrf.mxu0
        %v1421 = vadd.f32 0.0, %v1420
        %v1422 = vpop.f32.mrf.mxu0
        %v1423 = vpop.f32.mrf.mxu0
        %v1424 = vpop.f32.mrf.mxu0
        %1425 = vdwg.mxu0
        %v1427 = vsel %vm834, %v1282, 0
        %v1430 = vsel %vm1290, %v1286, 0
        %1432 = vmatprep.subr.bf16.mxu0 0
        %1433 = vmatpush1.bf16.msra.mxu0 0
        %1434 = vmatprep.subr.bf16.mxu0 0
        %1435 = vmatpush1.bf16.msra.mxu0 0
        %1436 = vmatprep.subr.bf16.mxu0 0
        %1437 = vmatpush1.bf16.msra.mxu0 0
        %1438 = vmatprep.subr.bf16.mxu0 0
        %1439 = vmatpush1.bf16.msra.mxu0 0
        %1440 = vmatprep.subr.bf16.mxu0 0
        %1441 = vmatpush1.bf16.msra.mxu0 0
        %1442 = vmatprep.subr.bf16.mxu0 0
        %1443 = vmatpush1.bf16.msra.mxu0 0
        %1444 = vmatprep.subr.bf16.mxu0 0
        %1445 = vmatpush1.bf16.msra.mxu0 0
        %1446 = vmatprep.subr.bf16.mxu0 0
        %1447 = vmatpush1.bf16.msra.mxu0 %v1430
        %1448 = vmatprep.subr.bf16.mxu0 0
        %1449 = vmatpush2.bf16.msra.mxu0 0
        %1450 = vmatprep.subr.bf16.mxu0 0
        %1451 = vmatpush2.bf16.msra.mxu0 0
        %1452 = vmatprep.subr.bf16.mxu0 0
        %1453 = vmatpush2.bf16.msra.mxu0 0
        %1454 = vmatprep.subr.bf16.mxu0 0
        %1455 = vmatpush2.bf16.msra.mxu0 0
        %1456 = vmatprep.subr.bf16.mxu0 0
        %1457 = vmatpush2.bf16.msra.mxu0 0
        %1458 = vmatprep.subr.bf16.mxu0 0
        %1459 = vmatpush2.bf16.msra.mxu0 0
        %1460 = vmatprep.subr.bf16.mxu0 0
        %1461 = vmatpush2.bf16.msra.mxu0 0
        %1462 = vmatprep.subr.bf16.mxu0 0
        %1463 = vmatpush2.bf16.msra.mxu0 0
        %1464 = vmatprep.mubr.bf16.mxu0 0
        %1465 = vmatmul.mubr.bf16.gmra.mxu0 %v1427
        %v1466 = vpop.f32.mrf.mxu0
        %v1467 = vadd.f32 0.0, %v1466
        %v1468 = vpop.f32.mrf.mxu0
        %v1469 = vpop.f32.mrf.mxu0
        %v1470 = vpop.f32.mrf.mxu0
        %1471 = vdwg.mxu0
        %vm1472 = vcmask 261120
        %v1473 = vsel %vm1472, %v1329, 0.0
        %v1474 = vsel %vm1472, %v1375, 0.0
        %v1475 = vadd.f32 %v1473, %v1474
        %v1476 = vsel %vm1472, %v1421, 0.0
        %v1477 = vadd.f32 %v1475, %v1476
        %v1478 = vsel %vm1472, %v1467, 0.0
        %v1479 = vadd.f32 %v1477, %v1478
        %v1480 = vld [vmem:[%s7] sm:$0x1]
        %v1482 = vlaneseq
        %v1483 = vshrl.u32 %v1482, 7
        %v1484 = vsub.s32 0, %v1483
        %v1485 = vrot.slane %v1480, %v1484
        %v1487 = vadd.f32 %v1479, %v1485
        %v1488 = vadd.f32 %v803, %v1487
        %v1489 = vld [vmem:[%s8] sm:$0x1]
        %v1490 = vld [vmem:[#allocation8] sm:$0x1]
        %v1491 = vsel %vm1472, %v1488, 0.0
        %1492 = vadd.xlane.f32.xlu0 %v1491
        %v1493 = vpop.xlane.xlu0 %1492
        %v1494 = vrcp.pop 32.0
        %v1495 = vmul.f32 %v1493, %v1494
        %v1496 = vsub.f32 %v1488, %v1495
        %v1497 = vmul.f32 %v1496, %v1496
        %v1498 = vsel %vm1472, %v1497, 0.0
        %1499 = vadd.xlane.f32.xlu0 %v1498
        %v1500 = vpop.xlane.xlu0 %1499
        %v1501 = vmul.f32 %v1500, %v1494
        %v1502 = vadd.f32 %v1501, 1e-05
        %v1503 = vrsqrt.pop %v1502
        %v1504 = vmul.f32 %v1496, %v1503
        %v1506 = vlaneseq
        %v1507 = vshrl.u32 %v1506, 7
        %v1508 = vsub.s32 0, %v1507
        %v1509 = vrot.slane %v1489, %v1508
        %v1511 = vmul.f32 %v1504, %v1509
        %v1513 = vlaneseq
        %v1514 = vshrl.u32 %v1513, 7
        %v1515 = vsub.s32 0, %v1514
        %v1516 = vrot.slane %v1490, %v1515
        %v1518 = vadd.f32 %v1511, %v1516
        %v1519 = vpack.c.bf16 %v1518, %v1518
        %v1520 = vld [vmem:[#allocation10] sm:$0xf]
        %v1521 = vld [vmem:[#allocation10 + $0x4] sm:$0xf]
        %v1522 = vld [vmem:[#allocation10 + $0x8] sm:$0xf]
        %v1523 = vld [vmem:[#allocation10 + $0xc] sm:$0xf]
        %v1524 = vld [vmem:[#allocation11] sm:$0x1]
        %v1526 = vlaneseq
        %v1527 = vshrl.u32 %v1526, 7
        %v1528 = vsub.s32 0, %v1527
        %v1529 = vrot.slane %v1524, %v1528
        %v1535 = vunpack.c.l.b16 %v1520
        %v1536 = vunpack.c.l.b16 %v1521
        %v1537 = vunpack.c.l.b16 %v1522
        %v1538 = vunpack.c.l.b16 %v1523
        %v1539 = vpack.c.b16 %v1536, %v1535
        %v1540 = vpack.c.b16 %v1538, %v1537
        %v1544 = vsel %vm1472, %v1519, 0
        %1546 = vmatprep.subr.bf16.mxu0 0
        %1547 = vmatpush1.bf16.msra.mxu0 0
        %1548 = vmatprep.subr.bf16.mxu0 0
        %1549 = vmatpush1.bf16.msra.mxu0 0
        %1550 = vmatprep.subr.bf16.mxu0 0
        %1551 = vmatpush1.bf16.msra.mxu0 0
        %1552 = vmatprep.subr.bf16.mxu0 0
        %1553 = vmatpush1.bf16.msra.mxu0 0
        %1554 = vmatprep.subr.bf16.mxu0 0
        %1555 = vmatpush1.bf16.msra.mxu0 0
        %1556 = vmatprep.subr.bf16.mxu0 0
        %1557 = vmatpush1.bf16.msra.mxu0 0
        %1558 = vmatprep.subr.bf16.mxu0 0
        %1559 = vmatpush1.bf16.msra.mxu0 %v1540
        %1560 = vmatprep.subr.bf16.mxu0 0
        %1561 = vmatpush1.bf16.msra.mxu0 %v1539
        %1562 = vmatprep.subr.bf16.mxu0 0
        %1563 = vmatpush2.bf16.msra.mxu0 0
        %1564 = vmatprep.subr.bf16.mxu0 0
        %1565 = vmatpush2.bf16.msra.mxu0 0
        %1566 = vmatprep.subr.bf16.mxu0 0
        %1567 = vmatpush2.bf16.msra.mxu0 0
        %1568 = vmatprep.subr.bf16.mxu0 0
        %1569 = vmatpush2.bf16.msra.mxu0 0
        %1570 = vmatprep.subr.bf16.mxu0 0
        %1571 = vmatpush2.bf16.msra.mxu0 0
        %1572 = vmatprep.subr.bf16.mxu0 0
        %1573 = vmatpush2.bf16.msra.mxu0 0
        %1574 = vmatprep.subr.bf16.mxu0 0
        %1575 = vmatpush2.bf16.msra.mxu0 0
        %1576 = vmatprep.subr.bf16.mxu0 0
        %1577 = vmatpush2.bf16.msra.mxu0 0
        %1578 = vmatprep.mubr.bf16.mxu0 0
        %1579 = vmatmul.mubr.bf16.gmra.mxu0 %v1544
        %v1580 = vpop.f32.mrf.mxu0
        %v1581 = vadd.f32 %v1529, %v1580
        %v1582 = vpop.f32.mrf.mxu0
        %v1583 = vpop.f32.mrf.mxu0
        %v1584 = vpop.f32.mrf.mxu0
        %1585 = vdwg.mxu0
        %v1586 = vmul.f32 %v1581, 0.5
        %v1587 = vmul.f32 %v1581, 0.70710677
        %v1588 = verf.f32.pop %v1587
        %v1589 = vadd.f32 %v1588, 1.0
        %v1590 = vmul.f32 %v1586, %v1589
        %v1591 = vpack.c.bf16 %v1590, %v1590
        %v1592 = vld [vmem:[%s12] sm:$0xf]
        %v1593 = vld [vmem:[%s12 + $0x4] sm:$0xf]
        %v1594 = vld [vmem:[%s12 + $0x8] sm:$0xf]
        %v1595 = vld [vmem:[%s12 + $0xc] sm:$0xf]
        %v1596 = vld [vmem:[%s12 + $0x10] sm:$0xf]
        %v1597 = vld [vmem:[%s12 + $0x14] sm:$0xf]
        %v1598 = vld [vmem:[%s12 + $0x18] sm:$0xf]
        %v1599 = vld [vmem:[%s12 + $0x1c] sm:$0xf]
        %v1600 = vld [vmem:[%s12 + $0x20] sm:$0xf]
        %v1601 = vld [vmem:[%s12 + $0x24] sm:$0xf]
        %v1602 = vld [vmem:[%s12 + $0x28] sm:$0xf]
        %v1603 = vld [vmem:[%s12 + $0x2c] sm:$0xf]
        %v1604 = vld [vmem:[%s12 + $0x30] sm:$0xf]
        %v1605 = vld [vmem:[%s12 + $0x34] sm:$0xf]
        %v1606 = vld [vmem:[%s12 + $0x38] sm:$0xf]
        %v1607 = vld [vmem:[%s12 + $0x3c] sm:$0xf]
        %v1608 = vld [vmem:[%s13] sm:$0x1]
        %v1610 = vlaneseq
        %v1611 = vshrl.u32 %v1610, 7
        %v1612 = vsub.s32 0, %v1611
        %v1613 = vrot.slane %v1608, %v1612
        %v1631 = vunpack.c.l.b16 %v1592
        %v1632 = vunpack.c.l.b16 %v1593
        %v1633 = vunpack.c.l.b16 %v1594
        %v1634 = vunpack.c.l.b16 %v1595
        %v1635 = vunpack.c.l.b16 %v1596
        %v1636 = vunpack.c.l.b16 %v1597
        %v1637 = vunpack.c.l.b16 %v1598
        %v1638 = vunpack.c.l.b16 %v1599
        %v1639 = vunpack.c.l.b16 %v1600
        %v1640 = vunpack.c.l.b16 %v1601
        %v1641 = vunpack.c.l.b16 %v1602
        %v1642 = vunpack.c.l.b16 %v1603
        %v1643 = vunpack.c.l.b16 %v1604
        %v1644 = vunpack.c.l.b16 %v1605
        %v1645 = vunpack.c.l.b16 %v1606
        %v1646 = vunpack.c.l.b16 %v1607
        %v1647 = vpack.c.b16 %v1632, %v1631
        %v1648 = vpack.c.b16 %v1634, %v1633
        %v1649 = vpack.c.b16 %v1636, %v1635
        %v1650 = vpack.c.b16 %v1638, %v1637
        %v1651 = vpack.c.b16 %v1640, %v1639
        %v1652 = vpack.c.b16 %v1642, %v1641
        %v1653 = vpack.c.b16 %v1644, %v1643
        %v1654 = vpack.c.b16 %v1646, %v1645
        %1663 = vmatprep.subr.bf16.mxu0 0
        %1664 = vmatpush1.bf16.msra.mxu0 %v1654
        %1665 = vmatprep.subr.bf16.mxu0 0
        %1666 = vmatpush1.bf16.msra.mxu0 %v1653
        %1667 = vmatprep.subr.bf16.mxu0 0
        %1668 = vmatpush1.bf16.msra.mxu0 %v1652
        %1669 = vmatprep.subr.bf16.mxu0 0
        %1670 = vmatpush1.bf16.msra.mxu0 %v1651
        %1671 = vmatprep.subr.bf16.mxu0 0
        %1672 = vmatpush1.bf16.msra.mxu0 %v1650
        %1673 = vmatprep.subr.bf16.mxu0 0
        %1674 = vmatpush1.bf16.msra.mxu0 %v1649
        %1675 = vmatprep.subr.bf16.mxu0 0
        %1676 = vmatpush1.bf16.msra.mxu0 %v1648
        %1677 = vmatprep.subr.bf16.mxu0 0
        %1678 = vmatpush1.bf16.msra.mxu0 %v1647
        %1679 = vmatprep.subr.bf16.mxu0 0
        %1680 = vmatpush2.bf16.msra.mxu0 0
        %1681 = vmatprep.subr.bf16.mxu0 0
        %1682 = vmatpush2.bf16.msra.mxu0 0
        %1683 = vmatprep.subr.bf16.mxu0 0
        %1684 = vmatpush2.bf16.msra.mxu0 0
        %1685 = vmatprep.subr.bf16.mxu0 0
        %1686 = vmatpush2.bf16.msra.mxu0 0
        %1687 = vmatprep.subr.bf16.mxu0 0
        %1688 = vmatpush2.bf16.msra.mxu0 0
        %1689 = vmatprep.subr.bf16.mxu0 0
        %1690 = vmatpush2.bf16.msra.mxu0 0
        %1691 = vmatprep.subr.bf16.mxu0 0
        %1692 = vmatpush2.bf16.msra.mxu0 0
        %1693 = vmatprep.subr.bf16.mxu0 0
        %1694 = vmatpush2.bf16.msra.mxu0 0
        %1695 = vmatprep.mubr.bf16.mxu0 0
        %1696 = vmatmul.mubr.bf16.gmra.mxu0 %v1591
        %v1697 = vpop.f32.mrf.mxu0
        %v1698 = vadd.f32 %v1613, %v1697
        %v1699 = vpop.f32.mrf.mxu0
        %v1700 = vpop.f32.mrf.mxu0
        %v1701 = vpop.f32.mrf.mxu0
        %1702 = vdwg.mxu0
        %v1703 = vadd.f32 %v1488, %v1698
        %1704 = vst.msk [vmem:[%s552] sm:$0xff] %vm1472, %v1703
        %s1705 = sand.u32 %s359, 1
        %s1706 = scalar_lea.sflag [#allocation7], %s1705
        %s1707 = sand.u32 %s359, 1
        %s1708 = smul.addr %s1707, 8
        %s1709 = scalar_lea.vmem [#allocation13], %s1708
        // Predicated region
        $region97: #{tpu_custom_call.1} parent=75 // pred_check
          %p1710 = pneg %p369
        $region98: #{tpu_custom_call.1} parent=75 // pred_check_branch
          %1712 = sbr.rel (%p1710) target = $region100
        $region99: #{tpu_custom_call.1} parent=75 // pred_region
          %s1714 = ssub.s32 128, 128
          %1715 = vsyncadd %s1706, %s1714
          %s1716 = smul.addr %s35, 2
          %s1717 = sadd.s32 %s36, %s1716
          %s1718 = smul.addr %s1717, 128
          %s1719 = scalar_lea.hbm %s14, %s1718
          %s1721 = sshll.u32 %s1709, 4
          %s1722 = int_to_ptr.vmem [resolvable:$true] %s1721
          %1724 = dma.vmem_to_hbm [thread:$0]  %s1722, 128, %s1719, %s1706
        $region100: #{tpu_custom_call.1} parent=75 // pred_fallthru
          _
      $region76: #{tpu_custom_call.1} parent=5 // pred_fallthru
        _
      %p1725 = scmp.le.s32.totalorder 2, %s26
      // Predicated region
      $region101: #{tpu_custom_call.1} parent=5 // pred_check
        %p1726 = pneg %p1725
      $region102: #{tpu_custom_call.1} parent=5 // pred_check_branch
        %1728 = sbr.rel (%p1726) target = $region104
      $region103: #{tpu_custom_call.1} parent=5 // pred_region
        %s1729 = ssub.s32 %s26, 2
        // Predicated region
        $region105: #{tpu_custom_call.1} parent=103 // pred_check
          %p1730 = pneg %p375
        $region106: #{tpu_custom_call.1} parent=103 // pred_check_branch
          %1732 = sbr.rel (%p1730) target = $region108
        $region107: #{tpu_custom_call.1} parent=103 // pred_region
          %s1733 = sand.u32 %s360, 1
          %s1734 = scalar_lea.sflag [#allocation7], %s1733
          %s1735 = sand.u32 %s360, 1
          %s1736 = smul.addr %s1735, 8
          %s1737 = scalar_lea.vmem [#allocation13], %s1736
          %1738 = dma.done %s1734, 128
        $region108: #{tpu_custom_call.1} parent=103 // pred_fallthru
          _
      $region104: #{tpu_custom_call.1} parent=5 // pred_fallthru
        _
    $region6: #{tpu_custom_call.1} parent=1 // loop_footer
      %s30 = sadd.s32 1, %s26
    $region7: #{tpu_custom_call.1} parent=1 // loop_footer_branch
      %25 = sbr.rel target = $region3
    $region8: #{tpu_custom_call.1} parent=1 // loop_exit
      _
    %1739 = vsyncpa [#allocation6], 1
    %s1740 = scalar_lea.sflag [#allocation6], 1
    %1741 = vsyncpa %s1740, 1
    %1742 = vsyncpa [#allocation9], 1
    %1743 = vsyncpa [#allocation12], 1
    %1744 = vsyncpa [#allocation7], 1
    %s1745 = scalar_lea.sflag [#allocation7], 1
    %1746 = vsyncpa %s1745, 1

</llo_original>
